<compile_context>
chip_gen: v6e
topology: v6e:2x2x1
jax: 0.10.0
libtpu: 0.0.40
codegen_flags: <defaults>
</compile_context>

<pallas_src>
import functools

import jax
import jax.numpy as jnp
from jax import lax
from jax.experimental import pallas as pl
from jax.experimental.pallas import tpu as pltpu


# ----------------------------------------------------------------------------
# Fused SABottleneck kernel: one grid step == one batch element.
# ----------------------------------------------------------------------------
def _sa_bottleneck_kernel(x_ref, w1_ref, w2_ref, w3_ref,
                          bn1_ref, bn2_ref, bn3_ref, sa_ref,
                          o_ref, pad_ref, *, H, W, gn_eps):
    HW = H * W
    width = w1_ref.shape[1]
    half_pad = (pad_ref.shape[0] - HW) // 2   # zero rows on each side (>= W+1)

    x = x_ref[0]                                                  # [HW, Cin] f32

    # ---- conv1 (1x1) + bn1 + ReLU  (bf16 MXU operands, f32 accumulate) ------
    h1 = jnp.dot(x.astype(jnp.bfloat16), w1_ref[...],
                 preferred_element_type=jnp.float32)
    h1 = jnp.maximum(h1 * bn1_ref[0:1, :] + bn1_ref[1:2, :], 0.0)  # [HW, width]

    # ---- conv2 (3x3, stride 1, pad 1) as 9 shifted matmuls ------------------
    # h1 lives in a zero-padded VMEM row buffer; each tap is a shifted window
    # (flat shift s = dy*W + dx).  Row wrap-around across image columns is
    # masked with a cheap per-row x-coordinate test (only needed for dx != 0).
    pad_ref[...] = jnp.zeros_like(pad_ref)
    pad_ref[half_pad:half_pad + HW, :] = h1

    x_id = lax.broadcasted_iota(jnp.int32, (HW, 1), 0) % W
    acc = jnp.zeros((HW, width), jnp.float32)
    for dy in (-1, 0, 1):
        for dx in (-1, 0, 1):
            t = (dy + 1) * 3 + (dx + 1)
            s = dy * W + dx
            tap = pad_ref[half_pad + s:half_pad + s + HW, :]       # shifted rows
            if dx != 0:
                valid = (x_id + dx >= 0) & (x_id + dx < W)
                tap = jnp.where(valid, tap, 0.0)
            acc = acc + jnp.dot(tap.astype(jnp.bfloat16), w2_ref[t],
                                preferred_element_type=jnp.float32)
    h2 = jnp.maximum(acc * bn2_ref[0:1, :] + bn2_ref[1:2, :], 0.0)  # [HW, width]

    # ---- conv3 (1x1, channel_shuffle folded into columns) + bn3 -------------
    h3 = jnp.dot(h2.astype(jnp.bfloat16), w3_ref[...],
                 preferred_element_type=jnp.float32)
    h3 = h3 * bn3_ref[0:1, :] + bn3_ref[1:2, :]                     # [HW, C]

    # ---- shuffle-attention gate (single sigmoid) + residual + ReLU ----------
    # arg = p*mean + q*(y-mean)*rsqrt(var+eps) + r ; p/q/r already encode the
    # channel-attention vs GroupNorm branch choice AND the channel shuffle.
    mean = jnp.mean(h3, axis=0, keepdims=True)                      # [1, C]
    ctr = h3 - mean
    var = jnp.mean(ctr * ctr, axis=0, keepdims=True)                # >= 0
    rstd = lax.rsqrt(var + gn_eps)
    arg = sa_ref[0:1, :] * mean + sa_ref[1:2, :] * (ctr * rstd) + sa_ref[2:3, :]
    gate = jax.nn.sigmoid(arg)

    o_ref[0] = jnp.maximum(h3 * gate + x, 0.0).astype(o_ref.dtype)


# ----------------------------------------------------------------------------
# Wrapper: NCHW <-> channels-last glue + pallas_call with a parallel batch grid
# ----------------------------------------------------------------------------
def sa_bottleneck_forward(x_nchw, params, *, gn_eps=1e-5):
    b, cin, h, w = x_nchw.shape
    width = params["w1"].shape[1]
    cout = params["w3"].shape[1]
    assert cin == cout, "identity residual requires inplanes == planes*4"
    hw = h * w
    pad_rows = max(8, ((w + 1 + 7) // 8) * 8)   # >= W+1 and 8-aligned

    x_flat = jnp.transpose(x_nchw, (0, 2, 3, 1)).reshape(b, hw, cin)

    kernel = functools.partial(_sa_bottleneck_kernel, H=h, W=w, gn_eps=gn_eps)

    grid_spec = pltpu.PrefetchScalarGridSpec(
        num_scalar_prefetch=0,
        grid=(b,),
        in_specs=[
            pl.BlockSpec((1, hw, cin), lambda i: (i, 0, 0)),        # x / identity
            pl.BlockSpec((cin, width), lambda i: (0, 0)),           # w1 (bf16)
            pl.BlockSpec((9, width, width), lambda i: (0, 0, 0)),   # w2 taps (bf16)
            pl.BlockSpec((width, cout), lambda i: (0, 0)),          # w3 (bf16, folded)
            pl.BlockSpec((2, width), lambda i: (0, 0)),             # bn1 scale/bias
            pl.BlockSpec((2, width), lambda i: (0, 0)),             # bn2 scale/bias
            pl.BlockSpec((2, cout), lambda i: (0, 0)),              # bn3 scale/bias
            pl.BlockSpec((3, cout), lambda i: (0, 0)),              # SA gate p/q/r
        ],
        out_specs=pl.BlockSpec((1, hw, cout), lambda i: (i, 0, 0)),
        scratch_shapes=[pltpu.VMEM((hw + 2 * pad_rows, width), jnp.float32)],
    )

    flops = 2 * b * hw * (cin * width + 9 * width * width + width * cout)
    bytes_accessed = (4 * b * hw * (cin + cout)
                      + 2 * (params["w1"].size + params["w2"].size + params["w3"].size)
                      + 4 * (params["bn1"].size + params["bn2"].size
                             + params["bn3"].size + params["sa_vec"].size))
    cost = pl.CostEstimate(flops=flops, transcendentals=b * hw * cout,
                           bytes_accessed=bytes_accessed)

    out = pl.pallas_call(
        kernel,
        out_shape=jax.ShapeDtypeStruct((b, hw, cout), jnp.float32),
        grid_spec=grid_spec,
        compiler_params=pltpu.CompilerParams(
            dimension_semantics=("parallel",),
            vmem_limit_bytes=32 * 1024 * 1024),
        cost_estimate=cost,
    )(x_flat, params["w1"], params["w2"], params["w3"],
      params["bn1"], params["bn2"], params["bn3"], params["sa_vec"])

    return jnp.transpose(out.reshape(b, h, w, cout), (0, 3, 1, 2))   # back to NCHW


# ----------------------------------------------------------------------------
# One-time parameter preparation: fold BN, channel_shuffle(2) and the SA gate
# coefficients (no runtime gathers in the hot path).
# ----------------------------------------------------------------------------
def prepare_params(*, w1, w2_hwio, w3, bn1_scale, bn1_bias, bn2_scale, bn2_bias,
                   bn3_scale, bn3_bias, cweight, cbias, sweight, sbias,
                   gn_weight, gn_bias, sa_groups):
    width = w1.shape[1]
    cout = w3.shape[1]
    cpg = cout // sa_groups          # channels per SA group
    half = cpg // 2

    # Per pre-shuffle channel k: first half of each SA group -> channel-attention
    # branch, second half -> per-channel GroupNorm branch (GroupNorm has
    # num_groups == num_channels, so its statistics are per-channel over space).
    k = jnp.arange(cout)
    j = k % cpg
    attn = j < half
    ia = jnp.clip(j, 0, half - 1)
    ig = jnp.clip(j - half, 0, half - 1)
    p_pre = jnp.where(attn, cweight[ia], 0.0)
    q_pre = jnp.where(attn, 0.0, sweight[ig] * gn_weight[ig])
    r_pre = jnp.where(attn, cbias[ia], sweight[ig] * gn_bias[ig] + sbias[ig])

    # channel_shuffle(groups=2): shuffled[c] = pre_shuffle[perm[c]]
    c = jnp.arange(cout)
    perm = (c % 2) * (cout // 2) + c // 2

    return {
        "w1": w1.astype(jnp.bfloat16),
        "w2": w2_hwio.reshape(9, width, width).astype(jnp.bfloat16),
        "w3": w3[:, perm].astype(jnp.bfloat16),
        "bn1": jnp.stack([bn1_scale, bn1_bias]).astype(jnp.float32),
        "bn2": jnp.stack([bn2_scale, bn2_bias]).astype(jnp.float32),
        "bn3": jnp.stack([bn3_scale[perm], bn3_bias[perm]]).astype(jnp.float32),
        "sa_vec": jnp.stack([p_pre[perm], q_pre[perm], r_pre[perm]]).astype(jnp.float32),
    }


# ----------------------------------------------------------------------------
# Pure-JAX reference mirroring the PyTorch forward (NCHW, unfolded params)
# ----------------------------------------------------------------------------
def reference_forward(x, *, w1, w2_hwio, w3, bn1_scale, bn1_bias, bn2_scale,
                      bn2_bias, bn3_scale, bn3_bias, cweight, cbias, sweight,
                      sbias, gn_weight, gn_bias, sa_groups, gn_eps):
    hp = lax.Precision.HIGHEST
    b, cin, h, w = x.shape

    h1 = jnp.einsum("bihw,io->bohw", x, w1, precision=hp)
    h1 = jnp.maximum(h1 * bn1_scale.reshape(1, -1, 1, 1)
                     + bn1_bias.reshape(1, -1, 1, 1), 0.0)

    h2 = lax.conv_general_dilated(
        h1, w2_hwio, window_strides=(1, 1), padding=((1, 1), (1, 1)),
        dimension_numbers=("NCHW", "HWIO", "NCHW"), precision=hp)
    h2 = jnp.maximum(h2 * bn2_scale.reshape(1, -1, 1, 1)
                     + bn2_bias.reshape(1, -1, 1, 1), 0.0)

    h3 = jnp.einsum("bihw,io->bohw", h2, w3, precision=hp)
    h3 = h3 * bn3_scale.reshape(1, -1, 1, 1) + bn3_bias.reshape(1, -1, 1, 1)

    # sa_layer
    c = h3.shape[1]
    half = c // (2 * sa_groups)
    xg = h3.reshape(b * sa_groups, c // sa_groups, h, w)
    x0, x1 = xg[:, :half], xg[:, half:]
    xn = jnp.mean(x0, axis=(2, 3), keepdims=True)
    xn = cweight.reshape(1, -1, 1, 1) * xn + cbias.reshape(1, -1, 1, 1)
    xn = x0 * jax.nn.sigmoid(xn)
    mu = jnp.mean(x1, axis=(2, 3), keepdims=True)
    var = jnp.mean((x1 - mu) ** 2, axis=(2, 3), keepdims=True)
    xs = (x1 - mu) / jnp.sqrt(var + gn_eps) * gn_weight.reshape(1, -1, 1, 1) \
        + gn_bias.reshape(1, -1, 1, 1)
    xs = sweight.reshape(1, -1, 1, 1) * xs + sbias.reshape(1, -1, 1, 1)
    xs = x1 * jax.nn.sigmoid(xs)
    out = jnp.concatenate([xn, xs], axis=1).reshape(b, c, h, w)
    # channel_shuffle(groups=2)
    out = out.reshape(b, 2, c // 2, h, w).transpose(0, 2, 1, 3, 4).reshape(b, c, h, w)
    out = out + x
    return jnp.maximum(out, 0.0)


if __name__ == "__main__":
    # SABottleneck(inplanes=128, planes=32): width=32, out channels=128,
    # stride=1, downsample=None  ->  identity add is valid.
    B, H, W = 2, 8, 8
    inplanes, planes = 128, 32
    width = planes
    cout = planes * 4
    sa_groups = 64
    gn_eps = 1e-5
    chalf = cout // (2 * sa_groups)

    key = jax.random.PRNGKey(0)
    ks = jax.random.split(key, 12)

    def q_bf16(a):   # quantize weights once so kernel & reference share values
        return a.astype(jnp.bfloat16).astype(jnp.float32)

    raw = dict(
        w1=q_bf16(0.1 * jax.random.normal(ks[1], (inplanes, width), jnp.float32)),
        w2_hwio=q_bf16(0.1 * jax.random.normal(ks[2], (3, 3, width, width), jnp.float32)),
        w3=q_bf16(0.1 * jax.random.normal(ks[3], (width, cout), jnp.float32)),
        bn1_scale=0.5 + jax.random.uniform(ks[4], (width,), jnp.float32),
        bn1_bias=0.1 * jax.random.normal(ks[5], (width,), jnp.float32),
        bn2_scale=0.5 + jax.random.uniform(ks[6], (width,), jnp.float32),
        bn2_bias=0.1 * jax.random.normal(ks[7], (width,), jnp.float32),
        bn3_scale=0.5 + jax.random.uniform(ks[8], (cout,), jnp.float32),
        bn3_bias=0.1 * jax.random.normal(ks[9], (cout,), jnp.float32),
        # sa_layer params (PyTorch inits cweight/sweight=0, cbias/sbias=1;
        # nontrivial values used here so both branches are exercised).
        cweight=jnp.full((chalf,), 0.5, jnp.float32),
        cbias=jnp.full((chalf,), 0.3, jnp.float32),
        sweight=jnp.full((chalf,), -0.4, jnp.float32),
        sbias=jnp.full((chalf,), 0.7, jnp.float32),
        gn_weight=jnp.full((chalf,), 1.2, jnp.float32),
        gn_bias=jnp.full((chalf,), -0.1, jnp.float32),
    )

    params = prepare_params(sa_groups=sa_groups, **raw)
    x = jax.random.normal(ks[0], (B, inplanes, H, W), jnp.float32)

    fwd = jax.jit(lambda xx, pp: sa_bottleneck_forward(xx, pp, gn_eps=gn_eps))
    out = jax.block_until_ready(fwd(x, params))
    ref = reference_forward(x, sa_groups=sa_groups, gn_eps=gn_eps, **raw)

    assert out.shape == (B, cout, H, W)
    max_err = float(jnp.max(jnp.abs(out - ref)))
    assert max_err < 5e-2, f"mismatch vs reference: max abs err = {max_err}"
    print("KERNEL_OK")
</pallas_src>

<mosaic_0001>
module attributes {stable_mosaic.version = 11 : i64} {
  func.func @_sa_bottleneck_kernel(%arg0: i32, %arg1: memref<1x64x128xf32, #tpu.memory_space<vmem>>, %arg2: memref<128x32xbf16, #tpu.memory_space<vmem>>, %arg3: memref<9x32x32xbf16, #tpu.memory_space<vmem>>, %arg4: memref<32x128xbf16, #tpu.memory_space<vmem>>, %arg5: memref<2x32xf32, #tpu.memory_space<vmem>>, %arg6: memref<2x32xf32, #tpu.memory_space<vmem>>, %arg7: memref<2x128xf32, #tpu.memory_space<vmem>>, %arg8: memref<3x128xf32, #tpu.memory_space<vmem>>, %arg9: memref<1x64x128xf32, #tpu.memory_space<vmem>>, %arg10: memref<96x32xf32, #tpu.memory_space<vmem>>) attributes {dimension_semantics = [#tpu.dimension_semantics<parallel>], iteration_bounds = array<i64: 2>, scalar_prefetch = 0 : i64, scratch_operands = 1 : i64, tpu.core_type = #tpu.core_type<tc>, window_params = [{transform_indices = @transform_0, window_bounds = array<i64: 1, 64, 128>}, {pipeline_mode = #tpu.pipeline_mode<synchronous>, transform_indices = @transform_1, window_bounds = array<i64: 128, 32>}, {pipeline_mode = #tpu.pipeline_mode<synchronous>, transform_indices = @transform_2, window_bounds = array<i64: 9, 32, 32>}, {pipeline_mode = #tpu.pipeline_mode<synchronous>, transform_indices = @transform_3, window_bounds = array<i64: 32, 128>}, {pipeline_mode = #tpu.pipeline_mode<synchronous>, transform_indices = @transform_4, window_bounds = array<i64: 2, 32>}, {pipeline_mode = #tpu.pipeline_mode<synchronous>, transform_indices = @transform_5, window_bounds = array<i64: 2, 32>}, {pipeline_mode = #tpu.pipeline_mode<synchronous>, transform_indices = @transform_6, window_bounds = array<i64: 2, 128>}, {pipeline_mode = #tpu.pipeline_mode<synchronous>, transform_indices = @transform_7, window_bounds = array<i64: 3, 128>}, {transform_indices = @transform_8, window_bounds = array<i64: 1, 64, 128>}]} {
    %c0 = arith.constant 0 : index
    %c0_0 = arith.constant 0 : index
    %c0_1 = arith.constant 0 : index
    %0 = vector.load %arg1[%c0, %c0_0, %c0_1] : memref<1x64x128xf32, #tpu.memory_space<vmem>>, vector<1x64x128xf32>
    %1 = vector.shape_cast %0 : vector<1x64x128xf32> to vector<64x128xf32>
    %2 = arith.truncf %1 : vector<64x128xf32> to vector<64x128xbf16>
    %c0_2 = arith.constant 0 : index
    %c0_3 = arith.constant 0 : index
    %3 = vector.load %arg2[%c0_2, %c0_3] : memref<128x32xbf16, #tpu.memory_space<vmem>>, vector<128x32xbf16>
    %cst = arith.constant dense<0.000000e+00> : vector<64x32xf32>
    %4 = tpu.matmul %2, %3, %cst {dimension_numbers = #tpu.dot_dimension_numbers<[1], [0], [0], [1], [0, 0, 1, 1], [], []>} : vector<64x128xbf16>, vector<128x32xbf16>, vector<64x32xf32> -> vector<64x32xf32>
    %c0_4 = arith.constant 0 : index
    %c0_5 = arith.constant 0 : index
    %5 = vector.load %arg5[%c0_4, %c0_5] : memref<2x32xf32, #tpu.memory_space<vmem>>, vector<1x32xf32>
    %6 = vector.broadcast %5 : vector<1x32xf32> to vector<64x32xf32>
    %7 = arith.mulf %4, %6 : vector<64x32xf32>
    %c1 = arith.constant 1 : index
    %c0_6 = arith.constant 0 : index
    %8 = vector.load %arg5[%c1, %c0_6] : memref<2x32xf32, #tpu.memory_space<vmem>>, vector<1x32xf32>
    %9 = vector.broadcast %8 : vector<1x32xf32> to vector<64x32xf32>
    %10 = arith.addf %7, %9 : vector<64x32xf32>
    %cst_7 = arith.constant 0.000000e+00 : f32
    %11 = vector.broadcast %cst_7 : f32 to vector<64x32xf32>
    %12 = arith.maximumf %10, %11 : vector<64x32xf32>
    %cst_8 = arith.constant 0.000000e+00 : f32
    %13 = vector.broadcast %cst_8 : f32 to vector<96x32xf32>
    %c0_9 = arith.constant 0 : index
    %c0_10 = arith.constant 0 : index
    %14 = vector.load %arg10[%c0_9, %c0_10] : memref<96x32xf32, #tpu.memory_space<vmem>>, vector<96x32xf32>
    tpu.vector_store %arg10[%c0_9, %c0_10], %13 {strides = array<i32>} : memref<96x32xf32, #tpu.memory_space<vmem>>, vector<96x32xf32>,
    %c16 = arith.constant 16 : index
    %c0_11 = arith.constant 0 : index
    %15 = vector.load %arg10[%c16, %c0_11] : memref<96x32xf32, #tpu.memory_space<vmem>>, vector<64x32xf32>
    tpu.vector_store %arg10[%c16, %c0_11], %12 {strides = array<i32>} : memref<96x32xf32, #tpu.memory_space<vmem>>, vector<64x32xf32>,
    %16 = tpu.iota {dimensions = array<i32: 0>} : vector<64x1xi32>
    %c8_i32 = arith.constant 8 : i32
    %c0_i32 = arith.constant 0 : i32
    %17 = arith.cmpi eq, %c8_i32, %c0_i32 : i32
    %c1_i32 = arith.constant 1 : i32
    %18 = arith.select %17, %c1_i32, %c8_i32 : i32
    %19 = vector.broadcast %18 : i32 to vector<64x1xi32>
    %20 = arith.remsi %16, %19 : vector<64x1xi32>
    %c0_i32_12 = arith.constant 0 : i32
    %21 = vector.broadcast %c0_i32_12 : i32 to vector<64x1xi32>
    %22 = arith.cmpi ne, %20, %21 : vector<64x1xi32>
    %c0_i32_13 = arith.constant 0 : i32
    %23 = vector.broadcast %c0_i32_13 : i32 to vector<64x1xi32>
    %24 = arith.cmpi slt, %20, %23 : vector<64x1xi32>
    %c0_i32_14 = arith.constant 0 : i32
    %25 = arith.cmpi slt, %18, %c0_i32_14 : i32
    %26 = vector.broadcast %25 : i1 to vector<64x1xi1>
    %27 = vector.broadcast %26 : vector<64x1xi1> to vector<64x1xi1>
    %28 = arith.xori %24, %27 : vector<64x1xi1>
    %29 = arith.andi %28, %22 : vector<64x1xi1>
    %30 = vector.broadcast %18 : i32 to vector<64x1xi32>
    %31 = arith.addi %20, %30 : vector<64x1xi32>
    %32 = arith.select %29, %31, %20 : vector<64x1xi1>, vector<64x1xi32>
    %cst_15 = arith.constant 0.000000e+00 : f32
    %33 = vector.broadcast %cst_15 : f32 to vector<64x32xf32>
    %c7 = arith.constant 7 : index
    %c0_16 = arith.constant 0 : index
    %34 = vector.load %arg10[%c7, %c0_16] : memref<96x32xf32, #tpu.memory_space<vmem>>, vector<64x32xf32>
    %c-1_i32 = arith.constant -1 : i32
    %35 = vector.broadcast %c-1_i32 : i32 to vector<64x1xi32>
    %36 = arith.addi %32, %35 : vector<64x1xi32>
    %c0_i32_17 = arith.constant 0 : i32
    %37 = vector.broadcast %c0_i32_17 : i32 to vector<64x1xi32>
    %38 = arith.cmpi sge, %36, %37 : vector<64x1xi32>
    %c-1_i32_18 = arith.constant -1 : i32
    %39 = vector.broadcast %c-1_i32_18 : i32 to vector<64x1xi32>
    %40 = arith.addi %32, %39 : vector<64x1xi32>
    %c8_i32_19 = arith.constant 8 : i32
    %41 = vector.broadcast %c8_i32_19 : i32 to vector<64x1xi32>
    %42 = arith.cmpi slt, %40, %41 : vector<64x1xi32>
    %43 = arith.andi %38, %42 : vector<64x1xi1>
    %cst_20 = arith.constant 0.000000e+00 : f32
    %44 = vector.shape_cast %43 : vector<64x1xi1> to vector<64x1xi1>
    %45 = vector.broadcast %44 : vector<64x1xi1> to vector<64x32xi1>
    %46 = vector.broadcast %cst_20 : f32 to vector<64x32xf32>
    %47 = arith.select %45, %34, %46 : vector<64x32xi1>, vector<64x32xf32>
    %48 = arith.truncf %47 : vector<64x32xf32> to vector<64x32xbf16>
    %c0_21 = arith.constant 0 : index
    %c0_22 = arith.constant 0 : index
    %c0_23 = arith.constant 0 : index
    %49 = vector.load %arg3[%c0_21, %c0_22, %c0_23] : memref<9x32x32xbf16, #tpu.memory_space<vmem>>, vector<1x32x32xbf16>
    %50 = vector.shape_cast %49 : vector<1x32x32xbf16> to vector<32x32xbf16>
    %cst_24 = arith.constant dense<0.000000e+00> : vector<64x32xf32>
    %51 = tpu.matmul %48, %50, %cst_24 {dimension_numbers = #tpu.dot_dimension_numbers<[1], [0], [0], [1], [0, 0, 1, 1], [], []>} : vector<64x32xbf16>, vector<32x32xbf16>, vector<64x32xf32> -> vector<64x32xf32>
    %52 = arith.addf %33, %51 : vector<64x32xf32>
    %c8 = arith.constant 8 : index
    %c0_25 = arith.constant 0 : index
    %53 = vector.load %arg10[%c8, %c0_25] : memref<96x32xf32, #tpu.memory_space<vmem>>, vector<64x32xf32>
    %54 = arith.truncf %53 : vector<64x32xf32> to vector<64x32xbf16>
    %c1_26 = arith.constant 1 : index
    %c0_27 = arith.constant 0 : index
    %c0_28 = arith.constant 0 : index
    %55 = vector.load %arg3[%c1_26, %c0_27, %c0_28] : memref<9x32x32xbf16, #tpu.memory_space<vmem>>, vector<1x32x32xbf16>
    %56 = vector.shape_cast %55 : vector<1x32x32xbf16> to vector<32x32xbf16>
    %cst_29 = arith.constant dense<0.000000e+00> : vector<64x32xf32>
    %57 = tpu.matmul %54, %56, %cst_29 {dimension_numbers = #tpu.dot_dimension_numbers<[1], [0], [0], [1], [0, 0, 1, 1], [], []>} : vector<64x32xbf16>, vector<32x32xbf16>, vector<64x32xf32> -> vector<64x32xf32>
    %58 = arith.addf %52, %57 : vector<64x32xf32>
    %c9 = arith.constant 9 : index
    %c0_30 = arith.constant 0 : index
    %59 = vector.load %arg10[%c9, %c0_30] : memref<96x32xf32, #tpu.memory_space<vmem>>, vector<64x32xf32>
    %c1_i32_31 = arith.constant 1 : i32
    %60 = vector.broadcast %c1_i32_31 : i32 to vector<64x1xi32>
    %61 = arith.addi %32, %60 : vector<64x1xi32>
    %c0_i32_32 = arith.constant 0 : i32
    %62 = vector.broadcast %c0_i32_32 : i32 to vector<64x1xi32>
    %63 = arith.cmpi sge, %61, %62 : vector<64x1xi32>
    %c1_i32_33 = arith.constant 1 : i32
    %64 = vector.broadcast %c1_i32_33 : i32 to vector<64x1xi32>
    %65 = arith.addi %32, %64 : vector<64x1xi32>
    %c8_i32_34 = arith.constant 8 : i32
    %66 = vector.broadcast %c8_i32_34 : i32 to vector<64x1xi32>
    %67 = arith.cmpi slt, %65, %66 : vector<64x1xi32>
    %68 = arith.andi %63, %67 : vector<64x1xi1>
    %cst_35 = arith.constant 0.000000e+00 : f32
    %69 = vector.shape_cast %68 : vector<64x1xi1> to vector<64x1xi1>
    %70 = vector.broadcast %69 : vector<64x1xi1> to vector<64x32xi1>
    %71 = vector.broadcast %cst_35 : f32 to vector<64x32xf32>
    %72 = arith.select %70, %59, %71 : vector<64x32xi1>, vector<64x32xf32>
    %73 = arith.truncf %72 : vector<64x32xf32> to vector<64x32xbf16>
    %c2 = arith.constant 2 : index
    %c0_36 = arith.constant 0 : index
    %c0_37 = arith.constant 0 : index
    %74 = vector.load %arg3[%c2, %c0_36, %c0_37] : memref<9x32x32xbf16, #tpu.memory_space<vmem>>, vector<1x32x32xbf16>
    %75 = vector.shape_cast %74 : vector<1x32x32xbf16> to vector<32x32xbf16>
    %cst_38 = arith.constant dense<0.000000e+00> : vector<64x32xf32>
    %76 = tpu.matmul %73, %75, %cst_38 {dimension_numbers = #tpu.dot_dimension_numbers<[1], [0], [0], [1], [0, 0, 1, 1], [], []>} : vector<64x32xbf16>, vector<32x32xbf16>, vector<64x32xf32> -> vector<64x32xf32>
    %77 = arith.addf %58, %76 : vector<64x32xf32>
    %c15 = arith.constant 15 : index
    %c0_39 = arith.constant 0 : index
    %78 = vector.load %arg10[%c15, %c0_39] : memref<96x32xf32, #tpu.memory_space<vmem>>, vector<64x32xf32>
    %c-1_i32_40 = arith.constant -1 : i32
    %79 = vector.broadcast %c-1_i32_40 : i32 to vector<64x1xi32>
    %80 = arith.addi %32, %79 : vector<64x1xi32>
    %c0_i32_41 = arith.constant 0 : i32
    %81 = vector.broadcast %c0_i32_41 : i32 to vector<64x1xi32>
    %82 = arith.cmpi sge, %80, %81 : vector<64x1xi32>
    %c-1_i32_42 = arith.constant -1 : i32
    %83 = vector.broadcast %c-1_i32_42 : i32 to vector<64x1xi32>
    %84 = arith.addi %32, %83 : vector<64x1xi32>
    %c8_i32_43 = arith.constant 8 : i32
    %85 = vector.broadcast %c8_i32_43 : i32 to vector<64x1xi32>
    %86 = arith.cmpi slt, %84, %85 : vector<64x1xi32>
    %87 = arith.andi %82, %86 : vector<64x1xi1>
    %cst_44 = arith.constant 0.000000e+00 : f32
    %88 = vector.shape_cast %87 : vector<64x1xi1> to vector<64x1xi1>
    %89 = vector.broadcast %88 : vector<64x1xi1> to vector<64x32xi1>
    %90 = vector.broadcast %cst_44 : f32 to vector<64x32xf32>
    %91 = arith.select %89, %78, %90 : vector<64x32xi1>, vector<64x32xf32>
    %92 = arith.truncf %91 : vector<64x32xf32> to vector<64x32xbf16>
    %c3 = arith.constant 3 : index
    %c0_45 = arith.constant 0 : index
    %c0_46 = arith.constant 0 : index
    %93 = vector.load %arg3[%c3, %c0_45, %c0_46] : memref<9x32x32xbf16, #tpu.memory_space<vmem>>, vector<1x32x32xbf16>
    %94 = vector.shape_cast %93 : vector<1x32x32xbf16> to vector<32x32xbf16>
    %cst_47 = arith.constant dense<0.000000e+00> : vector<64x32xf32>
    %95 = tpu.matmul %92, %94, %cst_47 {dimension_numbers = #tpu.dot_dimension_numbers<[1], [0], [0], [1], [0, 0, 1, 1], [], []>} : vector<64x32xbf16>, vector<32x32xbf16>, vector<64x32xf32> -> vector<64x32xf32>
    %96 = arith.addf %77, %95 : vector<64x32xf32>
    %c16_48 = arith.constant 16 : index
    %c0_49 = arith.constant 0 : index
    %97 = vector.load %arg10[%c16_48, %c0_49] : memref<96x32xf32, #tpu.memory_space<vmem>>, vector<64x32xf32>
    %98 = arith.truncf %97 : vector<64x32xf32> to vector<64x32xbf16>
    %c4 = arith.constant 4 : index
    %c0_50 = arith.constant 0 : index
    %c0_51 = arith.constant 0 : index
    %99 = vector.load %arg3[%c4, %c0_50, %c0_51] : memref<9x32x32xbf16, #tpu.memory_space<vmem>>, vector<1x32x32xbf16>
    %100 = vector.shape_cast %99 : vector<1x32x32xbf16> to vector<32x32xbf16>
    %cst_52 = arith.constant dense<0.000000e+00> : vector<64x32xf32>
    %101 = tpu.matmul %98, %100, %cst_52 {dimension_numbers = #tpu.dot_dimension_numbers<[1], [0], [0], [1], [0, 0, 1, 1], [], []>} : vector<64x32xbf16>, vector<32x32xbf16>, vector<64x32xf32> -> vector<64x32xf32>
    %102 = arith.addf %96, %101 : vector<64x32xf32>
    %c17 = arith.constant 17 : index
    %c0_53 = arith.constant 0 : index
    %103 = vector.load %arg10[%c17, %c0_53] : memref<96x32xf32, #tpu.memory_space<vmem>>, vector<64x32xf32>
    %c1_i32_54 = arith.constant 1 : i32
    %104 = vector.broadcast %c1_i32_54 : i32 to vector<64x1xi32>
    %105 = arith.addi %32, %104 : vector<64x1xi32>
    %c0_i32_55 = arith.constant 0 : i32
    %106 = vector.broadcast %c0_i32_55 : i32 to vector<64x1xi32>
    %107 = arith.cmpi sge, %105, %106 : vector<64x1xi32>
    %c1_i32_56 = arith.constant 1 : i32
    %108 = vector.broadcast %c1_i32_56 : i32 to vector<64x1xi32>
    %109 = arith.addi %32, %108 : vector<64x1xi32>
    %c8_i32_57 = arith.constant 8 : i32
    %110 = vector.broadcast %c8_i32_57 : i32 to vector<64x1xi32>
    %111 = arith.cmpi slt, %109, %110 : vector<64x1xi32>
    %112 = arith.andi %107, %111 : vector<64x1xi1>
    %cst_58 = arith.constant 0.000000e+00 : f32
    %113 = vector.shape_cast %112 : vector<64x1xi1> to vector<64x1xi1>
    %114 = vector.broadcast %113 : vector<64x1xi1> to vector<64x32xi1>
    %115 = vector.broadcast %cst_58 : f32 to vector<64x32xf32>
    %116 = arith.select %114, %103, %115 : vector<64x32xi1>, vector<64x32xf32>
    %117 = arith.truncf %116 : vector<64x32xf32> to vector<64x32xbf16>
    %c5 = arith.constant 5 : index
    %c0_59 = arith.constant 0 : index
    %c0_60 = arith.constant 0 : index
    %118 = vector.load %arg3[%c5, %c0_59, %c0_60] : memref<9x32x32xbf16, #tpu.memory_space<vmem>>, vector<1x32x32xbf16>
    %119 = vector.shape_cast %118 : vector<1x32x32xbf16> to vector<32x32xbf16>
    %cst_61 = arith.constant dense<0.000000e+00> : vector<64x32xf32>
    %120 = tpu.matmul %117, %119, %cst_61 {dimension_numbers = #tpu.dot_dimension_numbers<[1], [0], [0], [1], [0, 0, 1, 1], [], []>} : vector<64x32xbf16>, vector<32x32xbf16>, vector<64x32xf32> -> vector<64x32xf32>
    %121 = arith.addf %102, %120 : vector<64x32xf32>
    %c23 = arith.constant 23 : index
    %c0_62 = arith.constant 0 : index
    %122 = vector.load %arg10[%c23, %c0_62] : memref<96x32xf32, #tpu.memory_space<vmem>>, vector<64x32xf32>
    %c-1_i32_63 = arith.constant -1 : i32
    %123 = vector.broadcast %c-1_i32_63 : i32 to vector<64x1xi32>
    %124 = arith.addi %32, %123 : vector<64x1xi32>
    %c0_i32_64 = arith.constant 0 : i32
    %125 = vector.broadcast %c0_i32_64 : i32 to vector<64x1xi32>
    %126 = arith.cmpi sge, %124, %125 : vector<64x1xi32>
    %c-1_i32_65 = arith.constant -1 : i32
    %127 = vector.broadcast %c-1_i32_65 : i32 to vector<64x1xi32>
    %128 = arith.addi %32, %127 : vector<64x1xi32>
    %c8_i32_66 = arith.constant 8 : i32
    %129 = vector.broadcast %c8_i32_66 : i32 to vector<64x1xi32>
    %130 = arith.cmpi slt, %128, %129 : vector<64x1xi32>
    %131 = arith.andi %126, %130 : vector<64x1xi1>
    %cst_67 = arith.constant 0.000000e+00 : f32
    %132 = vector.shape_cast %131 : vector<64x1xi1> to vector<64x1xi1>
    %133 = vector.broadcast %132 : vector<64x1xi1> to vector<64x32xi1>
    %134 = vector.broadcast %cst_67 : f32 to vector<64x32xf32>
    %135 = arith.select %133, %122, %134 : vector<64x32xi1>, vector<64x32xf32>
    %136 = arith.truncf %135 : vector<64x32xf32> to vector<64x32xbf16>
    %c6 = arith.constant 6 : index
    %c0_68 = arith.constant 0 : index
    %c0_69 = arith.constant 0 : index
    %137 = vector.load %arg3[%c6, %c0_68, %c0_69] : memref<9x32x32xbf16, #tpu.memory_space<vmem>>, vector<1x32x32xbf16>
    %138 = vector.shape_cast %137 : vector<1x32x32xbf16> to vector<32x32xbf16>
    %cst_70 = arith.constant dense<0.000000e+00> : vector<64x32xf32>
    %139 = tpu.matmul %136, %138, %cst_70 {dimension_numbers = #tpu.dot_dimension_numbers<[1], [0], [0], [1], [0, 0, 1, 1], [], []>} : vector<64x32xbf16>, vector<32x32xbf16>, vector<64x32xf32> -> vector<64x32xf32>
    %140 = arith.addf %121, %139 : vector<64x32xf32>
    %c24 = arith.constant 24 : index
    %c0_71 = arith.constant 0 : index
    %141 = vector.load %arg10[%c24, %c0_71] : memref<96x32xf32, #tpu.memory_space<vmem>>, vector<64x32xf32>
    %142 = arith.truncf %141 : vector<64x32xf32> to vector<64x32xbf16>
    %c7_72 = arith.constant 7 : index
    %c0_73 = arith.constant 0 : index
    %c0_74 = arith.constant 0 : index
    %143 = vector.load %arg3[%c7_72, %c0_73, %c0_74] : memref<9x32x32xbf16, #tpu.memory_space<vmem>>, vector<1x32x32xbf16>
    %144 = vector.shape_cast %143 : vector<1x32x32xbf16> to vector<32x32xbf16>
    %cst_75 = arith.constant dense<0.000000e+00> : vector<64x32xf32>
    %145 = tpu.matmul %142, %144, %cst_75 {dimension_numbers = #tpu.dot_dimension_numbers<[1], [0], [0], [1], [0, 0, 1, 1], [], []>} : vector<64x32xbf16>, vector<32x32xbf16>, vector<64x32xf32> -> vector<64x32xf32>
    %146 = arith.addf %140, %145 : vector<64x32xf32>
    %c25 = arith.constant 25 : index
    %c0_76 = arith.constant 0 : index
    %147 = vector.load %arg10[%c25, %c0_76] : memref<96x32xf32, #tpu.memory_space<vmem>>, vector<64x32xf32>
    %c1_i32_77 = arith.constant 1 : i32
    %148 = vector.broadcast %c1_i32_77 : i32 to vector<64x1xi32>
    %149 = arith.addi %32, %148 : vector<64x1xi32>
    %c0_i32_78 = arith.constant 0 : i32
    %150 = vector.broadcast %c0_i32_78 : i32 to vector<64x1xi32>
    %151 = arith.cmpi sge, %149, %150 : vector<64x1xi32>
    %c1_i32_79 = arith.constant 1 : i32
    %152 = vector.broadcast %c1_i32_79 : i32 to vector<64x1xi32>
    %153 = arith.addi %32, %152 : vector<64x1xi32>
    %c8_i32_80 = arith.constant 8 : i32
    %154 = vector.broadcast %c8_i32_80 : i32 to vector<64x1xi32>
    %155 = arith.cmpi slt, %153, %154 : vector<64x1xi32>
    %156 = arith.andi %151, %155 : vector<64x1xi1>
    %cst_81 = arith.constant 0.000000e+00 : f32
    %157 = vector.shape_cast %156 : vector<64x1xi1> to vector<64x1xi1>
    %158 = vector.broadcast %157 : vector<64x1xi1> to vector<64x32xi1>
    %159 = vector.broadcast %cst_81 : f32 to vector<64x32xf32>
    %160 = arith.select %158, %147, %159 : vector<64x32xi1>, vector<64x32xf32>
    %161 = arith.truncf %160 : vector<64x32xf32> to vector<64x32xbf16>
    %c8_82 = arith.constant 8 : index
    %c0_83 = arith.constant 0 : index
    %c0_84 = arith.constant 0 : index
    %162 = vector.load %arg3[%c8_82, %c0_83, %c0_84] : memref<9x32x32xbf16, #tpu.memory_space<vmem>>, vector<1x32x32xbf16>
    %163 = vector.shape_cast %162 : vector<1x32x32xbf16> to vector<32x32xbf16>
    %cst_85 = arith.constant dense<0.000000e+00> : vector<64x32xf32>
    %164 = tpu.matmul %161, %163, %cst_85 {dimension_numbers = #tpu.dot_dimension_numbers<[1], [0], [0], [1], [0, 0, 1, 1], [], []>} : vector<64x32xbf16>, vector<32x32xbf16>, vector<64x32xf32> -> vector<64x32xf32>
    %165 = arith.addf %146, %164 : vector<64x32xf32>
    %c0_86 = arith.constant 0 : index
    %c0_87 = arith.constant 0 : index
    %166 = vector.load %arg6[%c0_86, %c0_87] : memref<2x32xf32, #tpu.memory_space<vmem>>, vector<1x32xf32>
    %167 = vector.broadcast %166 : vector<1x32xf32> to vector<64x32xf32>
    %168 = arith.mulf %165, %167 : vector<64x32xf32>
    %c1_88 = arith.constant 1 : index
    %c0_89 = arith.constant 0 : index
    %169 = vector.load %arg6[%c1_88, %c0_89] : memref<2x32xf32, #tpu.memory_space<vmem>>, vector<1x32xf32>
    %170 = vector.broadcast %169 : vector<1x32xf32> to vector<64x32xf32>
    %171 = arith.addf %168, %170 : vector<64x32xf32>
    %cst_90 = arith.constant 0.000000e+00 : f32
    %172 = vector.broadcast %cst_90 : f32 to vector<64x32xf32>
    %173 = arith.maximumf %171, %172 : vector<64x32xf32>
    %174 = arith.truncf %173 : vector<64x32xf32> to vector<64x32xbf16>
    %c0_91 = arith.constant 0 : index
    %c0_92 = arith.constant 0 : index
    %175 = vector.load %arg4[%c0_91, %c0_92] : memref<32x128xbf16, #tpu.memory_space<vmem>>, vector<32x128xbf16>
    %cst_93 = arith.constant dense<0.000000e+00> : vector<64x128xf32>
    %176 = tpu.matmul %174, %175, %cst_93 {dimension_numbers = #tpu.dot_dimension_numbers<[1], [0], [0], [1], [0, 0, 1, 1], [], []>} : vector<64x32xbf16>, vector<32x128xbf16>, vector<64x128xf32> -> vector<64x128xf32>
    %c0_94 = arith.constant 0 : index
    %c0_95 = arith.constant 0 : index
    %177 = vector.load %arg7[%c0_94, %c0_95] : memref<2x128xf32, #tpu.memory_space<vmem>>, vector<1x128xf32>
    %178 = vector.broadcast %177 : vector<1x128xf32> to vector<64x128xf32>
    %179 = arith.mulf %176, %178 : vector<64x128xf32>
    %c1_96 = arith.constant 1 : index
    %c0_97 = arith.constant 0 : index
    %180 = vector.load %arg7[%c1_96, %c0_97] : memref<2x128xf32, #tpu.memory_space<vmem>>, vector<1x128xf32>
    %181 = vector.broadcast %180 : vector<1x128xf32> to vector<64x128xf32>
    %182 = arith.addf %179, %181 : vector<64x128xf32>
    %cst_98 = arith.constant dense<0.000000e+00> : vector<128xf32>
    %183 = vector.multi_reduction <add>, %182, %cst_98 [0] : vector<64x128xf32> to vector<128xf32>
    %184 = vector.shape_cast %183 : vector<128xf32> to vector<1x128xf32>
    %cst_99 = arith.constant 6.400000e+01 : f32
    %185 = vector.broadcast %cst_99 : f32 to vector<1x128xf32>
    %186 = arith.divf %184, %185 : vector<1x128xf32>
    %187 = vector.broadcast %186 : vector<1x128xf32> to vector<64x128xf32>
    %188 = arith.subf %182, %187 : vector<64x128xf32>
    %189 = arith.mulf %188, %188 : vector<64x128xf32>
    %cst_100 = arith.constant dense<0.000000e+00> : vector<128xf32>
    %190 = vector.multi_reduction <add>, %189, %cst_100 [0] : vector<64x128xf32> to vector<128xf32>
    %191 = vector.shape_cast %190 : vector<128xf32> to vector<1x128xf32>
    %cst_101 = arith.constant 6.400000e+01 : f32
    %192 = vector.broadcast %cst_101 : f32 to vector<1x128xf32>
    %193 = arith.divf %191, %192 : vector<1x128xf32>
    %cst_102 = arith.constant 9.99999974E-6 : f32
    %194 = vector.broadcast %cst_102 : f32 to vector<1x128xf32>
    %195 = arith.addf %193, %194 : vector<1x128xf32>
    %196 = math.rsqrt %195 : vector<1x128xf32>
    %c0_103 = arith.constant 0 : index
    %c0_104 = arith.constant 0 : index
    %197 = vector.load %arg8[%c0_103, %c0_104] : memref<3x128xf32, #tpu.memory_space<vmem>>, vector<1x128xf32>
    %198 = arith.mulf %197, %186 : vector<1x128xf32>
    %c1_105 = arith.constant 1 : index
    %c0_106 = arith.constant 0 : index
    %199 = vector.load %arg8[%c1_105, %c0_106] : memref<3x128xf32, #tpu.memory_space<vmem>>, vector<1x128xf32>
    %200 = vector.broadcast %196 : vector<1x128xf32> to vector<64x128xf32>
    %201 = arith.mulf %188, %200 : vector<64x128xf32>
    %202 = vector.broadcast %199 : vector<1x128xf32> to vector<64x128xf32>
    %203 = arith.mulf %202, %201 : vector<64x128xf32>
    %204 = vector.broadcast %198 : vector<1x128xf32> to vector<64x128xf32>
    %205 = arith.addf %204, %203 : vector<64x128xf32>
    %c2_107 = arith.constant 2 : index
    %c0_108 = arith.constant 0 : index
    %206 = vector.load %arg8[%c2_107, %c0_108] : memref<3x128xf32, #tpu.memory_space<vmem>>, vector<1x128xf32>
    %207 = vector.broadcast %206 : vector<1x128xf32> to vector<64x128xf32>
    %208 = arith.addf %205, %207 : vector<64x128xf32>
    %209 = arith.negf %208 : vector<64x128xf32>
    %210 = math.exp %209 : vector<64x128xf32>
    %cst_109 = arith.constant 1.000000e+00 : f32
    %211 = vector.broadcast %cst_109 : f32 to vector<64x128xf32>
    %212 = arith.addf %211, %210 : vector<64x128xf32>
    %213 = arith.divf %211, %212 : vector<64x128xf32>
    %214 = arith.mulf %182, %213 : vector<64x128xf32>
    %215 = arith.addf %214, %1 : vector<64x128xf32>
    %cst_110 = arith.constant 0.000000e+00 : f32
    %216 = vector.broadcast %cst_110 : f32 to vector<64x128xf32>
    %217 = arith.maximumf %215, %216 : vector<64x128xf32>
    %c0_111 = arith.constant 0 : index
    %c0_112 = arith.constant 0 : index
    %c0_113 = arith.constant 0 : index
    %218 = vector.load %arg9[%c0_111, %c0_112, %c0_113] : memref<1x64x128xf32, #tpu.memory_space<vmem>>, vector<1x64x128xf32>
    %219 = vector.shape_cast %218 : vector<1x64x128xf32> to vector<64x128xf32>
    %220 = vector.shape_cast %217 : vector<64x128xf32> to vector<1x64x128xf32>
    tpu.vector_store %arg9[%c0_111, %c0_112, %c0_113], %220 {strides = array<i32>} : memref<1x64x128xf32, #tpu.memory_space<vmem>>, vector<1x64x128xf32>,
    return
  }
  func.func @transform_0(%arg0: i32) -> (i32, i32, i32) {
    %c0_i32 = arith.constant 0 : i32
    %c0_i32_0 = arith.constant 0 : i32
    %c0_i32_1 = arith.constant 0 : i32
    return %arg0, %c0_i32, %c0_i32_0 : i32, i32, i32
  }
  func.func @transform_1(%arg0: i32) -> (i32, i32) {
    %c0_i32 = arith.constant 0 : i32
    %c0_i32_0 = arith.constant 0 : i32
    %c0_i32_1 = arith.constant 0 : i32
    return %c0_i32, %c0_i32_0 : i32, i32
  }
  func.func @transform_2(%arg0: i32) -> (i32, i32, i32) {
    %c0_i32 = arith.constant 0 : i32
    %c0_i32_0 = arith.constant 0 : i32
    %c0_i32_1 = arith.constant 0 : i32
    %c0_i32_2 = arith.constant 0 : i32
    return %c0_i32, %c0_i32_0, %c0_i32_1 : i32, i32, i32
  }
  func.func @transform_3(%arg0: i32) -> (i32, i32) {
    %c0_i32 = arith.constant 0 : i32
    %c0_i32_0 = arith.constant 0 : i32
    %c0_i32_1 = arith.constant 0 : i32
    return %c0_i32, %c0_i32_0 : i32, i32
  }
  func.func @transform_4(%arg0: i32) -> (i32, i32) {
    %c0_i32 = arith.constant 0 : i32
    %c0_i32_0 = arith.constant 0 : i32
    %c0_i32_1 = arith.constant 0 : i32
    return %c0_i32, %c0_i32_0 : i32, i32
  }
  func.func @transform_5(%arg0: i32) -> (i32, i32) {
    %c0_i32 = arith.constant 0 : i32
    %c0_i32_0 = arith.constant 0 : i32
    %c0_i32_1 = arith.constant 0 : i32
    return %c0_i32, %c0_i32_0 : i32, i32
  }
  func.func @transform_6(%arg0: i32) -> (i32, i32) {
    %c0_i32 = arith.constant 0 : i32
    %c0_i32_0 = arith.constant 0 : i32
    %c0_i32_1 = arith.constant 0 : i32
    return %c0_i32, %c0_i32_0 : i32, i32
  }
  func.func @transform_7(%arg0: i32) -> (i32, i32) {
    %c0_i32 = arith.constant 0 : i32
    %c0_i32_0 = arith.constant 0 : i32
    %c0_i32_1 = arith.constant 0 : i32
    return %c0_i32, %c0_i32_0 : i32, i32
  }
  func.func @transform_8(%arg0: i32) -> (i32, i32, i32) {
    %c0_i32 = arith.constant 0 : i32
    %c0_i32_0 = arith.constant 0 : i32
    %c0_i32_1 = arith.constant 0 : i32
    return %arg0, %c0_i32, %c0_i32_0 : i32, i32, i32
  }
}

</mosaic_0001>

<llo_original>
// kernel: _lambda_.1
$region0: #{_lambda_.1}
  #allocation0 [shape = 'u32[]', space=smem, size = 0x4, offset = 0x4, fixed_abs, tag = 'smem constant byte address 0x4 - core index']
  #allocation1 [shape = 'u32[144,128]{1,0:T(1,128)}', space=vmem, size = 0x12000, scoped, tag = 'internal scratch']
  #allocation2 [shape = 'f32[96,32]{1,0:T(8,128)}', space=vmem, size = 0xc000, scoped, tag = 'scratch operand']
  %s0 = inlined_call_operand.hbm [shape: f32[2,64,128], index: 0, kind: input, shape index: {}]
  %s1 = inlined_call_operand.vmem [shape: bf16[128,32], index: 1, kind: input, shape index: {}]
  %s2 = inlined_call_operand.hbm [shape: bf16[9,32,32], index: 2, kind: input, shape index: {}]
  %s3 = inlined_call_operand.vmem [shape: bf16[32,128], index: 3, kind: input, shape index: {}]
  %s4 = inlined_call_operand.vmem [shape: f32[2,32], index: 4, kind: input, shape index: {}]
  %s5 = inlined_call_operand.vmem [shape: f32[2,32], index: 5, kind: input, shape index: {}]
  %s6 = inlined_call_operand.vmem [shape: f32[2,128], index: 6, kind: input, shape index: {}]
  %s7 = inlined_call_operand.vmem [shape: f32[3,128], index: 7, kind: input, shape index: {}]
  %s8 = inlined_call_operand.hbm [shape: f32[2,64,128], index: 8, kind: output, shape index: {}]
  %s9 = sld [smem:[#allocation0]]
  $region73: #{_lambda_.1} parent=0
    _
  %s11 = ssub.s32 1, %s9
  %s12 = scalar_select 0, %s11, %s9
  $region1: #{_lambda_.1} parent=0
    #allocation3 [shape = 'u8[65536]{0}', space=vmem, size = 0x10000, scoped, tag = 'input window, operand 0']
    #allocation4 [shape = 's32[2]{0}', space=sflag, size = 0x8, scoped, tag = 'scoped memory for _lambda_.1']
    #allocation5 [shape = 's32[2]{0}', space=sflag, size = 0x8, scoped, tag = 'scoped memory for _lambda_.1']
    #allocation6 [shape = 'u8[73728]{0}', space=vmem, size = 0x12000, scoped, tag = 'input window, operand 2, single buffered']
    #allocation7 [shape = 's32[1]{0}', space=sflag, size = 0x4, scoped, tag = 'scoped memory for _lambda_.1']
    #allocation8 [shape = 'u8[65536]{0}', space=vmem, size = 0x10000, scoped, tag = 'output window, operand 0']
    %13 = vsyncpa [#allocation4], 0
    %s14 = scalar_lea.sflag [#allocation4], 1
    %15 = vsyncpa %s14, 0
    %16 = vsyncpa [#allocation7], 0
    %17 = vsyncpa [#allocation5], 0
    %s18 = scalar_lea.sflag [#allocation5], 1
    %19 = vsyncpa %s18, 0
    loop: start=0, step=1, limit=4
    $region2: #{_lambda_.1} parent=1 // loop_pre_header
      _
    $region3: #{_lambda_.1} parent=1 // loop_header
      %s21 = sphi 0, %s25
      %p22 = scmp.ge.s32.totalorder %s21, 4
      %s31 = sphi 0, %s33
      %s34 = sphi 0, %s31
      %s35 = sphi 0, %s34
      %s51 = sphi 0, %s35
      %s55 = sphi 0, %s55
      %s57 = sphi 0, %s55
      %s58 = sphi 0, %s57
      %s72 = sphi 0, %s58
      %s76 = sphi 0, %s76
      %s78 = sphi 0, %s76
      %s79 = sphi 0, %s78
      %s93 = sphi 0, %s79
      %s97 = sphi 0, %s97
      %s99 = sphi 0, %s97
      %s100 = sphi 0, %s99
      %s114 = sphi 0, %s100
      %s118 = sphi 0, %s118
      %s120 = sphi 0, %s118
      %s121 = sphi 0, %s120
      %s135 = sphi 0, %s121
      %s139 = sphi 0, %s139
      %s141 = sphi 0, %s139
      %s142 = sphi 0, %s141
      %s156 = sphi 0, %s142
      %s160 = sphi 0, %s160
      %s162 = sphi 0, %s160
      %s163 = sphi 0, %s162
      %s177 = sphi 0, %s163
      %s181 = sphi 0, %s181
      %s183 = sphi 0, %s181
      %s184 = sphi 0, %s183
      %s198 = sphi 0, %s184
      %s204 = sphi 0, %s206
      %s207 = sphi 0, %s204
      %s208 = sphi 0, %s207
      %s224 = sphi 0, %s208
    $region4: #{_lambda_.1} parent=1 // loop_header_branch
      %24 = sbr.rel (%p22) target = $region8
    $region5: #{_lambda_.1} parent=1 // loop_body
      %s26 = ssub.s32 %s21, 1
      %s27 = ssub.s32 %s21, 2
      %s28 = sadd.s32 %s21, 1
      %s29 = ssub.s32 %s21, %s28
      %p30 = scmp.eq.s32.totalorder %s29, 0
      %s32 = sadd.s32 %s31, 1
      %s33 = scalar_select %p30, %s31, %s32
      %p36 = pneg %p30
      %p37 = scmp.eq.s32.totalorder %s21, 1
      %p38 = por %p36, %p37
      %p39 = scmp.ne.s32.totalorder %s31, %s34
      %p40 = scmp.eq.s32.totalorder %s21, 0
      %p41 = por %p39, %p40
      %p42 = scmp.ne.s32.totalorder %s31, %s34
      %p43 = scmp.eq.s32.totalorder %s26, 1
      %p44 = por %p42, %p43
      %p45 = scmp.ne.s32.totalorder %s34, %s35
      %p46 = scmp.eq.s32.totalorder %s26, 0
      %p47 = por %p45, %p46
      %p48 = scmp.ne.s32.totalorder %s34, %s35
      %p49 = scmp.eq.s32.totalorder %s27, 1
      %p50 = por %p48, %p49
      %p52 = scmp.ne.s32.totalorder %s35, %s51
      %p53 = scmp.eq.s32.totalorder %s27, 0
      %p54 = por %p52, %p53
      %s56 = sadd.s32 %s55, 1
      %p59 = scmp.eq.s32.totalorder %s21, 1
      %p60 = scmp.ne.s32.totalorder %s55, %s57
      %p61 = scmp.eq.s32.totalorder %s21, 0
      %p62 = por %p60, %p61
      %p63 = scmp.ne.s32.totalorder %s55, %s57
      %p64 = scmp.eq.s32.totalorder %s26, 1
      %p65 = por %p63, %p64
      %p66 = scmp.ne.s32.totalorder %s57, %s58
      %p67 = scmp.eq.s32.totalorder %s26, 0
      %p68 = por %p66, %p67
      %p69 = scmp.ne.s32.totalorder %s57, %s58
      %p70 = scmp.eq.s32.totalorder %s27, 1
      %p71 = por %p69, %p70
      %p73 = scmp.ne.s32.totalorder %s58, %s72
      %p74 = scmp.eq.s32.totalorder %s27, 0
      %p75 = por %p73, %p74
      %s77 = sadd.s32 %s76, 1
      %p80 = scmp.eq.s32.totalorder %s21, 1
      %p81 = scmp.ne.s32.totalorder %s76, %s78
      %p82 = scmp.eq.s32.totalorder %s21, 0
      %p83 = por %p81, %p82
      %p84 = scmp.ne.s32.totalorder %s76, %s78
      %p85 = scmp.eq.s32.totalorder %s26, 1
      %p86 = por %p84, %p85
      %p87 = scmp.ne.s32.totalorder %s78, %s79
      %p88 = scmp.eq.s32.totalorder %s26, 0
      %p89 = por %p87, %p88
      %p90 = scmp.ne.s32.totalorder %s78, %s79
      %p91 = scmp.eq.s32.totalorder %s27, 1
      %p92 = por %p90, %p91
      %p94 = scmp.ne.s32.totalorder %s79, %s93
      %p95 = scmp.eq.s32.totalorder %s27, 0
      %p96 = por %p94, %p95
      %s98 = sadd.s32 %s97, 1
      %p101 = scmp.eq.s32.totalorder %s21, 1
      %p102 = scmp.ne.s32.totalorder %s97, %s99
      %p103 = scmp.eq.s32.totalorder %s21, 0
      %p104 = por %p102, %p103
      %p105 = scmp.ne.s32.totalorder %s97, %s99
      %p106 = scmp.eq.s32.totalorder %s26, 1
      %p107 = por %p105, %p106
      %p108 = scmp.ne.s32.totalorder %s99, %s100
      %p109 = scmp.eq.s32.totalorder %s26, 0
      %p110 = por %p108, %p109
      %p111 = scmp.ne.s32.totalorder %s99, %s100
      %p112 = scmp.eq.s32.totalorder %s27, 1
      %p113 = por %p111, %p112
      %p115 = scmp.ne.s32.totalorder %s100, %s114
      %p116 = scmp.eq.s32.totalorder %s27, 0
      %p117 = por %p115, %p116
      %s119 = sadd.s32 %s118, 1
      %p122 = scmp.eq.s32.totalorder %s21, 1
      %p123 = scmp.ne.s32.totalorder %s118, %s120
      %p124 = scmp.eq.s32.totalorder %s21, 0
      %p125 = por %p123, %p124
      %p126 = scmp.ne.s32.totalorder %s118, %s120
      %p127 = scmp.eq.s32.totalorder %s26, 1
      %p128 = por %p126, %p127
      %p129 = scmp.ne.s32.totalorder %s120, %s121
      %p130 = scmp.eq.s32.totalorder %s26, 0
      %p131 = por %p129, %p130
      %p132 = scmp.ne.s32.totalorder %s120, %s121
      %p133 = scmp.eq.s32.totalorder %s27, 1
      %p134 = por %p132, %p133
      %p136 = scmp.ne.s32.totalorder %s121, %s135
      %p137 = scmp.eq.s32.totalorder %s27, 0
      %p138 = por %p136, %p137
      %s140 = sadd.s32 %s139, 1
      %p143 = scmp.eq.s32.totalorder %s21, 1
      %p144 = scmp.ne.s32.totalorder %s139, %s141
      %p145 = scmp.eq.s32.totalorder %s21, 0
      %p146 = por %p144, %p145
      %p147 = scmp.ne.s32.totalorder %s139, %s141
      %p148 = scmp.eq.s32.totalorder %s26, 1
      %p149 = por %p147, %p148
      %p150 = scmp.ne.s32.totalorder %s141, %s142
      %p151 = scmp.eq.s32.totalorder %s26, 0
      %p152 = por %p150, %p151
      %p153 = scmp.ne.s32.totalorder %s141, %s142
      %p154 = scmp.eq.s32.totalorder %s27, 1
      %p155 = por %p153, %p154
      %p157 = scmp.ne.s32.totalorder %s142, %s156
      %p158 = scmp.eq.s32.totalorder %s27, 0
      %p159 = por %p157, %p158
      %s161 = sadd.s32 %s160, 1
      %p164 = scmp.eq.s32.totalorder %s21, 1
      %p165 = scmp.ne.s32.totalorder %s160, %s162
      %p166 = scmp.eq.s32.totalorder %s21, 0
      %p167 = por %p165, %p166
      %p168 = scmp.ne.s32.totalorder %s160, %s162
      %p169 = scmp.eq.s32.totalorder %s26, 1
      %p170 = por %p168, %p169
      %p171 = scmp.ne.s32.totalorder %s162, %s163
      %p172 = scmp.eq.s32.totalorder %s26, 0
      %p173 = por %p171, %p172
      %p174 = scmp.ne.s32.totalorder %s162, %s163
      %p175 = scmp.eq.s32.totalorder %s27, 1
      %p176 = por %p174, %p175
      %p178 = scmp.ne.s32.totalorder %s163, %s177
      %p179 = scmp.eq.s32.totalorder %s27, 0
      %p180 = por %p178, %p179
      %s182 = sadd.s32 %s181, 1
      %p185 = scmp.eq.s32.totalorder %s21, 1
      %p186 = scmp.ne.s32.totalorder %s181, %s183
      %p187 = scmp.eq.s32.totalorder %s21, 0
      %p188 = por %p186, %p187
      %p189 = scmp.ne.s32.totalorder %s181, %s183
      %p190 = scmp.eq.s32.totalorder %s26, 1
      %p191 = por %p189, %p190
      %p192 = scmp.ne.s32.totalorder %s183, %s184
      %p193 = scmp.eq.s32.totalorder %s26, 0
      %p194 = por %p192, %p193
      %p195 = scmp.ne.s32.totalorder %s183, %s184
      %p196 = scmp.eq.s32.totalorder %s27, 1
      %p197 = por %p195, %p196
      %p199 = scmp.ne.s32.totalorder %s184, %s198
      %p200 = scmp.eq.s32.totalorder %s27, 0
      %p201 = por %p199, %p200
      %s202 = ssub.s32 %s21, %s28
      %p203 = scmp.eq.s32.totalorder %s202, 0
      %s205 = sadd.s32 %s204, 1
      %s206 = scalar_select %p203, %s204, %s205
      %p209 = pneg %p203
      %p210 = scmp.eq.s32.totalorder %s21, 1
      %p211 = por %p209, %p210
      %p212 = scmp.ne.s32.totalorder %s204, %s207
      %p213 = scmp.eq.s32.totalorder %s21, 0
      %p214 = por %p212, %p213
      %p215 = scmp.ne.s32.totalorder %s204, %s207
      %p216 = scmp.eq.s32.totalorder %s26, 1
      %p217 = por %p215, %p216
      %p218 = scmp.ne.s32.totalorder %s207, %s208
      %p219 = scmp.eq.s32.totalorder %s26, 0
      %p220 = por %p218, %p219
      %p221 = scmp.ne.s32.totalorder %s207, %s208
      %p222 = scmp.eq.s32.totalorder %s27, 1
      %p223 = por %p221, %p222
      %p225 = scmp.ne.s32.totalorder %s208, %s224
      %p226 = scmp.eq.s32.totalorder %s27, 0
      %p227 = por %p225, %p226
      %p228 = scmp.le.s32.totalorder 1, %s21
      %p229 = scmp.lt.s32.totalorder %s21, 3
      %p230 = pnand %p228, %p229
      %p231 = pneg %p230
      // Predicated region
      $region9: #{_lambda_.1} parent=5 // pred_check
        _
      $region10: #{_lambda_.1} parent=5 // pred_check_branch
        %233 = sbr.rel (%p230) target = $region12
      $region11: #{_lambda_.1} parent=5 // pred_region
        %s234 = ssub.s32 %s21, 1
        // Predicated region
        $region13: #{_lambda_.1} parent=11 // pred_check
          %p235 = pneg %p68
        $region14: #{_lambda_.1} parent=11 // pred_check_branch
          %237 = sbr.rel (%p235) target = $region16
        $region15: #{_lambda_.1} parent=11 // pred_region
          _
        $region16: #{_lambda_.1} parent=11 // pred_fallthru
          _
        // Predicated region
        $region17: #{_lambda_.1} parent=11 // pred_check
          %p238 = pneg %p89
        $region18: #{_lambda_.1} parent=11 // pred_check_branch
          %240 = sbr.rel (%p238) target = $region20
        $region19: #{_lambda_.1} parent=11 // pred_region
          %s242 = ssub.s32 2304, 2304
          %243 = vsyncadd [#allocation7], %s242
          %s244 = sshll.u32 [#allocation6], 4
          %s245 = int_to_ptr.vmem [resolvable:$true] %s244
          %250 = dma.hbm_to_vmem [thread:$0]  %s2, 2304, %s245, [#allocation7], 64, 64, 4
        $region20: #{_lambda_.1} parent=11 // pred_fallthru
          _
        // Predicated region
        $region21: #{_lambda_.1} parent=11 // pred_check
          %p251 = pneg %p110
        $region22: #{_lambda_.1} parent=11 // pred_check_branch
          %253 = sbr.rel (%p251) target = $region24
        $region23: #{_lambda_.1} parent=11 // pred_region
          _
        $region24: #{_lambda_.1} parent=11 // pred_fallthru
          _
        // Predicated region
        $region25: #{_lambda_.1} parent=11 // pred_check
          %p254 = pneg %p131
        $region26: #{_lambda_.1} parent=11 // pred_check_branch
          %256 = sbr.rel (%p254) target = $region28
        $region27: #{_lambda_.1} parent=11 // pred_region
          _
        $region28: #{_lambda_.1} parent=11 // pred_fallthru
          _
        // Predicated region
        $region29: #{_lambda_.1} parent=11 // pred_check
          %p257 = pneg %p152
        $region30: #{_lambda_.1} parent=11 // pred_check_branch
          %259 = sbr.rel (%p257) target = $region32
        $region31: #{_lambda_.1} parent=11 // pred_region
          _
        $region32: #{_lambda_.1} parent=11 // pred_fallthru
          _
        // Predicated region
        $region33: #{_lambda_.1} parent=11 // pred_check
          %p260 = pneg %p173
        $region34: #{_lambda_.1} parent=11 // pred_check_branch
          %262 = sbr.rel (%p260) target = $region36
        $region35: #{_lambda_.1} parent=11 // pred_region
          _
        $region36: #{_lambda_.1} parent=11 // pred_fallthru
          _
        // Predicated region
        $region37: #{_lambda_.1} parent=11 // pred_check
          %p263 = pneg %p194
        $region38: #{_lambda_.1} parent=11 // pred_check_branch
          %265 = sbr.rel (%p263) target = $region40
        $region39: #{_lambda_.1} parent=11 // pred_region
          _
        $region40: #{_lambda_.1} parent=11 // pred_fallthru
          _
      $region12: #{_lambda_.1} parent=5 // pred_fallthru
        _
      %p266 = scmp.lt.s32.totalorder %s21, 2
      // Predicated region
      $region41: #{_lambda_.1} parent=5 // pred_check
        %p267 = pneg %p266
      $region42: #{_lambda_.1} parent=5 // pred_check_branch
        %269 = sbr.rel (%p267) target = $region44
      $region43: #{_lambda_.1} parent=5 // pred_region
        // Predicated region
        $region45: #{_lambda_.1} parent=43 // pred_check
          %p270 = pneg %p41
        $region46: #{_lambda_.1} parent=43 // pred_check_branch
          %272 = sbr.rel (%p270) target = $region48
        $region47: #{_lambda_.1} parent=43 // pred_region
          %s273 = sand.u32 %s31, 1
          %s274 = scalar_lea.sflag [#allocation4], %s273
          %s275 = sand.u32 %s31, 1
          %s276 = smul.addr %s275, 64
          %s277 = scalar_lea.vmem [#allocation3], %s276
          %s279 = ssub.s32 1024, 1024
          %280 = vsyncadd %s274, %s279
          %s281 = smul.addr %s21, 8
          %s282 = smul.addr %s281, 128
          %s283 = scalar_lea.hbm %s0, %s282
          %s284 = sshll.u32 %s277, 4
          %s285 = int_to_ptr.vmem [resolvable:$true] %s284
          %290 = dma.hbm_to_vmem [thread:$0]  %s283, 1024, %s285, %s274, 128, 128, 8
        $region48: #{_lambda_.1} parent=43 // pred_fallthru
          _
      $region44: #{_lambda_.1} parent=5 // pred_fallthru
        _
      %p291 = scmp.le.s32.totalorder 1, %s21
      %p292 = scmp.lt.s32.totalorder %s21, 3
      %p293 = pnand %p291, %p292
      %p294 = pneg %p293
      // Predicated region
      $region49: #{_lambda_.1} parent=5 // pred_check
        _
      $region50: #{_lambda_.1} parent=5 // pred_check_branch
        %296 = sbr.rel (%p293) target = $region52
      $region51: #{_lambda_.1} parent=5 // pred_region
        %s297 = ssub.s32 %s21, 1
        %s298 = sand.u32 %s34, 1
        %s299 = scalar_lea.sflag [#allocation4], %s298
        %s300 = sand.u32 %s34, 1
        %s301 = smul.addr %s300, 64
        %s302 = scalar_lea.vmem [#allocation3], %s301
        // Predicated region
        $region53: #{_lambda_.1} parent=51 // pred_check
          %p303 = pneg %p47
        $region54: #{_lambda_.1} parent=51 // pred_check_branch
          %305 = sbr.rel (%p303) target = $region56
        $region55: #{_lambda_.1} parent=51 // pred_region
          %306 = dma.done %s299, 1024
        $region56: #{_lambda_.1} parent=51 // pred_fallthru
          _
        // Predicated region
        $region57: #{_lambda_.1} parent=51 // pred_check
          %p307 = pneg %p89
        $region58: #{_lambda_.1} parent=51 // pred_check_branch
          %309 = sbr.rel (%p307) target = $region60
        $region59: #{_lambda_.1} parent=51 // pred_region
          %310 = dma.done [#allocation7], 2304
        $region60: #{_lambda_.1} parent=51 // pred_fallthru
          _
        %s311 = sand.u32 %s34, 1
        %s312 = scalar_lea.sflag [#allocation4], %s311
        %s313 = sand.u32 %s34, 1
        %s314 = smul.addr %s313, 64
        %s315 = scalar_lea.vmem [#allocation3], %s314
        %p316 = pneg %p47
        %p317 = pneg %p44
        %p318 = pneg %p68
        %p319 = pneg %p65
        %p320 = pneg %p89
        %p321 = pneg %p86
        %p322 = pneg %p110
        %p323 = pneg %p107
        %p324 = pneg %p131
        %p325 = pneg %p128
        %p326 = pneg %p152
        %p327 = pneg %p149
        %p328 = pneg %p173
        %p329 = pneg %p170
        %p330 = pneg %p194
        %p331 = pneg %p191
        %p332 = pneg %p220
        %p333 = pneg %p217
        %s334 = sand.u32 %s207, 1
        %s335 = scalar_lea.sflag [#allocation5], %s334
        %s336 = sand.u32 %s207, 1
        %s337 = smul.addr %s336, 64
        %s338 = scalar_lea.vmem [#allocation8], %s337
        %v340 = vld [vmem:[%s302] sm:$0xff]
        %v341 = vld [vmem:[%s302 + $0x8] sm:$0xff]
        %v342 = vld [vmem:[%s302 + $0x10] sm:$0xff]
        %v343 = vld [vmem:[%s302 + $0x18] sm:$0xff]
        %v344 = vld [vmem:[%s302 + $0x20] sm:$0xff]
        %v345 = vld [vmem:[%s302 + $0x28] sm:$0xff]
        %v346 = vld [vmem:[%s302 + $0x30] sm:$0xff]
        %v347 = vld [vmem:[%s302 + $0x38] sm:$0xff]
        %v348 = vpack.c.bf16 %v341, %v340
        %v349 = vpack.c.bf16 %v343, %v342
        %v350 = vpack.c.bf16 %v345, %v344
        %v351 = vpack.c.bf16 %v347, %v346
        %v352 = vld [vmem:[%s1] sm:$0xf]
        %v353 = vld [vmem:[%s1 + $0x4] sm:$0xf]
        %v354 = vld [vmem:[%s1 + $0x8] sm:$0xf]
        %v355 = vld [vmem:[%s1 + $0xc] sm:$0xf]
        %v356 = vld [vmem:[%s1 + $0x10] sm:$0xf]
        %v357 = vld [vmem:[%s1 + $0x14] sm:$0xf]
        %v358 = vld [vmem:[%s1 + $0x18] sm:$0xf]
        %v359 = vld [vmem:[%s1 + $0x1c] sm:$0xf]
        %v360 = vld [vmem:[%s1 + $0x20] sm:$0xf]
        %v361 = vld [vmem:[%s1 + $0x24] sm:$0xf]
        %v362 = vld [vmem:[%s1 + $0x28] sm:$0xf]
        %v363 = vld [vmem:[%s1 + $0x2c] sm:$0xf]
        %v364 = vld [vmem:[%s1 + $0x30] sm:$0xf]
        %v365 = vld [vmem:[%s1 + $0x34] sm:$0xf]
        %v366 = vld [vmem:[%s1 + $0x38] sm:$0xf]
        %v367 = vld [vmem:[%s1 + $0x3c] sm:$0xf]
        %v384 = vunpack.c.l.b16 %v352
        %v385 = vunpack.c.l.b16 %v353
        %v386 = vunpack.c.l.b16 %v354
        %v387 = vunpack.c.l.b16 %v355
        %v388 = vunpack.c.l.b16 %v356
        %v389 = vunpack.c.l.b16 %v357
        %v390 = vunpack.c.l.b16 %v358
        %v391 = vunpack.c.l.b16 %v359
        %v392 = vunpack.c.l.b16 %v360
        %v393 = vunpack.c.l.b16 %v361
        %v394 = vunpack.c.l.b16 %v362
        %v395 = vunpack.c.l.b16 %v363
        %v396 = vunpack.c.l.b16 %v364
        %v397 = vunpack.c.l.b16 %v365
        %v398 = vunpack.c.l.b16 %v366
        %v399 = vunpack.c.l.b16 %v367
        %v400 = vpack.c.b16 %v385, %v384
        %v401 = vpack.c.b16 %v387, %v386
        %v402 = vpack.c.b16 %v389, %v388
        %v403 = vpack.c.b16 %v391, %v390
        %v404 = vpack.c.b16 %v393, %v392
        %v405 = vpack.c.b16 %v395, %v394
        %v406 = vpack.c.b16 %v397, %v396
        %v407 = vpack.c.b16 %v399, %v398
        %416 = vmatprep.subr.bf16.mxu0 0
        %417 = vmatpush1.bf16.msra.mxu0 %v407
        %418 = vmatprep.subr.bf16.mxu0 0
        %419 = vmatpush1.bf16.msra.mxu0 %v406
        %420 = vmatprep.subr.bf16.mxu0 0
        %421 = vmatpush1.bf16.msra.mxu0 %v405
        %422 = vmatprep.subr.bf16.mxu0 0
        %423 = vmatpush1.bf16.msra.mxu0 %v404
        %424 = vmatprep.subr.bf16.mxu0 0
        %425 = vmatpush1.bf16.msra.mxu0 %v403
        %426 = vmatprep.subr.bf16.mxu0 0
        %427 = vmatpush1.bf16.msra.mxu0 %v402
        %428 = vmatprep.subr.bf16.mxu0 0
        %429 = vmatpush1.bf16.msra.mxu0 %v401
        %430 = vmatprep.subr.bf16.mxu0 0
        %431 = vmatpush1.bf16.msra.mxu0 %v400
        %432 = vmatprep.subr.bf16.mxu0 0
        %433 = vmatpush2.bf16.msra.mxu0 0
        %434 = vmatprep.subr.bf16.mxu0 0
        %435 = vmatpush2.bf16.msra.mxu0 0
        %436 = vmatprep.subr.bf16.mxu0 0
        %437 = vmatpush2.bf16.msra.mxu0 0
        %438 = vmatprep.subr.bf16.mxu0 0
        %439 = vmatpush2.bf16.msra.mxu0 0
        %440 = vmatprep.subr.bf16.mxu0 0
        %441 = vmatpush2.bf16.msra.mxu0 0
        %442 = vmatprep.subr.bf16.mxu0 0
        %443 = vmatpush2.bf16.msra.mxu0 0
        %444 = vmatprep.subr.bf16.mxu0 0
        %445 = vmatpush2.bf16.msra.mxu0 0
        %446 = vmatprep.subr.bf16.mxu0 0
        %447 = vmatpush2.bf16.msra.mxu0 0
        %448 = vmatprep.mubr.bf16.mxu0 0
        %449 = vmatmul.mubr.bf16.gmra.mxu0 %v348
        %v450 = vpop.f32.mrf.mxu0
        %v451 = vadd.f32 0.0, %v450
        %v452 = vpop.f32.mrf.mxu0
        %v453 = vpop.f32.mrf.mxu0
        %v454 = vadd.f32 0.0, %v453
        %v455 = vpop.f32.mrf.mxu0
        %456 = vmatprep.mubr.bf16.mxu0 0
        %457 = vmatmul.mubr.bf16.gmra.mxu0 %v349
        %v458 = vpop.f32.mrf.mxu0
        %v459 = vadd.f32 0.0, %v458
        %v460 = vpop.f32.mrf.mxu0
        %v461 = vpop.f32.mrf.mxu0
        %v462 = vadd.f32 0.0, %v461
        %v463 = vpop.f32.mrf.mxu0
        %464 = vmatprep.mubr.bf16.mxu0 0
        %465 = vmatmul.mubr.bf16.gmra.mxu0 %v350
        %v466 = vpop.f32.mrf.mxu0
        %v467 = vadd.f32 0.0, %v466
        %v468 = vpop.f32.mrf.mxu0
        %v469 = vpop.f32.mrf.mxu0
        %v470 = vadd.f32 0.0, %v469
        %v471 = vpop.f32.mrf.mxu0
        %472 = vmatprep.mubr.bf16.mxu0 0
        %473 = vmatmul.mubr.bf16.gmra.mxu0 %v351
        %v474 = vpop.f32.mrf.mxu0
        %v475 = vadd.f32 0.0, %v474
        %v476 = vpop.f32.mrf.mxu0
        %v477 = vpop.f32.mrf.mxu0
        %v478 = vadd.f32 0.0, %v477
        %v479 = vpop.f32.mrf.mxu0
        %480 = vdwg.mxu0
        %v481 = vld [vmem:[%s4] sm:$0x1]
        %v482 = vlaneseq
        %v483 = vshrl.u32 %v482, 7
        %v484 = vsub.s32 0, %v483
        %v485 = vrot.slane %v481, %v484
        %v486 = vmul.f32 %v451, %v485
        %v487 = vmul.f32 %v454, %v485
        %v488 = vmul.f32 %v459, %v485
        %v489 = vmul.f32 %v462, %v485
        %v490 = vmul.f32 %v467, %v485
        %v491 = vmul.f32 %v470, %v485
        %v492 = vmul.f32 %v475, %v485
        %v493 = vmul.f32 %v478, %v485
        %v494 = vld [vmem:[%s4 + $0x1] sm:$0x1]
        %v495 = vlaneseq
        %v496 = vshrl.u32 %v495, 7
        %v497 = vsub.s32 0, %v496
        %v498 = vrot.slane %v494, %v497
        %v499 = vadd.f32 %v486, %v498
        %v500 = vadd.f32 %v487, %v498
        %v501 = vadd.f32 %v488, %v498
        %v502 = vadd.f32 %v489, %v498
        %v503 = vadd.f32 %v490, %v498
        %v504 = vadd.f32 %v491, %v498
        %v505 = vadd.f32 %v492, %v498
        %v506 = vadd.f32 %v493, %v498
        %v507 = vmax.f32 %v499, 0.0
        %v508 = vmax.f32 %v500, 0.0
        %v509 = vmax.f32 %v501, 0.0
        %v510 = vmax.f32 %v502, 0.0
        %v511 = vmax.f32 %v503, 0.0
        %v512 = vmax.f32 %v504, 0.0
        %v513 = vmax.f32 %v505, 0.0
        %v514 = vmax.f32 %v506, 0.0
        %vm515 = vcmask 261120
        %516 = vst.msk [vmem:[#allocation2] sm:$0xff] %vm515, 0.0
        %517 = vst.msk [vmem:[#allocation2 + $0x8] sm:$0xff] %vm515, 0.0
        %518 = vst.msk [vmem:[#allocation2 + $0x10] sm:$0xff] %vm515, 0.0
        %519 = vst.msk [vmem:[#allocation2 + $0x18] sm:$0xff] %vm515, 0.0
        %520 = vst.msk [vmem:[#allocation2 + $0x20] sm:$0xff] %vm515, 0.0
        %521 = vst.msk [vmem:[#allocation2 + $0x28] sm:$0xff] %vm515, 0.0
        %522 = vst.msk [vmem:[#allocation2 + $0x30] sm:$0xff] %vm515, 0.0
        %523 = vst.msk [vmem:[#allocation2 + $0x38] sm:$0xff] %vm515, 0.0
        %524 = vst.msk [vmem:[#allocation2 + $0x40] sm:$0xff] %vm515, 0.0
        %525 = vst.msk [vmem:[#allocation2 + $0x48] sm:$0xff] %vm515, 0.0
        %526 = vst.msk [vmem:[#allocation2 + $0x50] sm:$0xff] %vm515, 0.0
        %527 = vst.msk [vmem:[#allocation2 + $0x58] sm:$0xff] %vm515, 0.0
        %528 = vst.msk [vmem:[#allocation2 + $0x10] sm:$0xff] %vm515, %v507
        %529 = vst.msk [vmem:[#allocation2 + $0x18] sm:$0xff] %vm515, %v508
        %530 = vst.msk [vmem:[#allocation2 + $0x20] sm:$0xff] %vm515, %v509
        %531 = vst.msk [vmem:[#allocation2 + $0x28] sm:$0xff] %vm515, %v510
        %532 = vst.msk [vmem:[#allocation2 + $0x30] sm:$0xff] %vm515, %v511
        %533 = vst.msk [vmem:[#allocation2 + $0x38] sm:$0xff] %vm515, %v512
        %534 = vst.msk [vmem:[#allocation2 + $0x40] sm:$0xff] %vm515, %v513
        %535 = vst.msk [vmem:[#allocation2 + $0x48] sm:$0xff] %vm515, %v514
        %v536 = vlaneseq
        %v537 = vshrl.u32 %v536, 7
        %v538 = vadd.s32 %v537, 8
        %v539 = vadd.s32 %v537, 16
        %v540 = vadd.s32 %v537, 24
        %v541 = vadd.s32 %v537, 32
        %v542 = vadd.s32 %v537, 40
        %v543 = vadd.s32 %v537, 48
        %v544 = vadd.s32 %v537, 56
        %vm545 = vcmp.lt.s32.totalorder %v537, 0
        %v546 = vsub.s32 0, %v537
        %v547 = vsel %vm545, %v546, %v537
        %v548 = vshrl.u32 %v547, 3
        %v549 = vand.u32 %v547, 7
        %v550 = vsub.s32 0, %v549
        %v551 = vsel %vm545, %v550, %v549
        %vm552 = vcmp.lt.s32.totalorder %v538, 0
        %v553 = vsub.s32 0, %v538
        %v554 = vsel %vm552, %v553, %v538
        %v555 = vshrl.u32 %v554, 3
        %v556 = vand.u32 %v554, 7
        %v557 = vsub.s32 0, %v556
        %v558 = vsel %vm552, %v557, %v556
        %vm559 = vcmp.lt.s32.totalorder %v539, 0
        %v560 = vsub.s32 0, %v539
        %v561 = vsel %vm559, %v560, %v539
        %v562 = vshrl.u32 %v561, 3
        %v563 = vand.u32 %v561, 7
        %v564 = vsub.s32 0, %v563
        %v565 = vsel %vm559, %v564, %v563
        %vm566 = vcmp.lt.s32.totalorder %v540, 0
        %v567 = vsub.s32 0, %v540
        %v568 = vsel %vm566, %v567, %v540
        %v569 = vshrl.u32 %v568, 3
        %v570 = vand.u32 %v568, 7
        %v571 = vsub.s32 0, %v570
        %v572 = vsel %vm566, %v571, %v570
        %vm573 = vcmp.lt.s32.totalorder %v541, 0
        %v574 = vsub.s32 0, %v541
        %v575 = vsel %vm573, %v574, %v541
        %v576 = vshrl.u32 %v575, 3
        %v577 = vand.u32 %v575, 7
        %v578 = vsub.s32 0, %v577
        %v579 = vsel %vm573, %v578, %v577
        %vm580 = vcmp.lt.s32.totalorder %v542, 0
        %v581 = vsub.s32 0, %v542
        %v582 = vsel %vm580, %v581, %v542
        %v583 = vshrl.u32 %v582, 3
        %v584 = vand.u32 %v582, 7
        %v585 = vsub.s32 0, %v584
        %v586 = vsel %vm580, %v585, %v584
        %vm587 = vcmp.lt.s32.totalorder %v543, 0
        %v588 = vsub.s32 0, %v543
        %v589 = vsel %vm587, %v588, %v543
        %v590 = vshrl.u32 %v589, 3
        %v591 = vand.u32 %v589, 7
        %v592 = vsub.s32 0, %v591
        %v593 = vsel %vm587, %v592, %v591
        %vm594 = vcmp.lt.s32.totalorder %v544, 0
        %v595 = vsub.s32 0, %v544
        %v596 = vsel %vm594, %v595, %v544
        %v597 = vshrl.u32 %v596, 3
        %v598 = vand.u32 %v596, 7
        %v599 = vsub.s32 0, %v598
        %v600 = vsel %vm594, %v599, %v598
        %vm601 = vcmp.ne.s32.totalorder %v551, 0
        %vm602 = vcmp.ne.s32.totalorder %v558, 0
        %vm603 = vcmp.ne.s32.totalorder %v565, 0
        %vm604 = vcmp.ne.s32.totalorder %v572, 0
        %vm605 = vcmp.ne.s32.totalorder %v579, 0
        %vm606 = vcmp.ne.s32.totalorder %v586, 0
        %vm607 = vcmp.ne.s32.totalorder %v593, 0
        %vm608 = vcmp.ne.s32.totalorder %v600, 0
        %vm609 = vcmp.lt.s32.totalorder %v551, 0
        %vm610 = vcmp.lt.s32.totalorder %v558, 0
        %vm611 = vcmp.lt.s32.totalorder %v565, 0
        %vm612 = vcmp.lt.s32.totalorder %v572, 0
        %vm613 = vcmp.lt.s32.totalorder %v579, 0
        %vm614 = vcmp.lt.s32.totalorder %v586, 0
        %vm615 = vcmp.lt.s32.totalorder %v593, 0
        %vm616 = vcmp.lt.s32.totalorder %v600, 0
        %vm617 = vmand %vm609, %vm601
        %vm618 = vmand %vm610, %vm602
        %vm619 = vmand %vm611, %vm603
        %vm620 = vmand %vm612, %vm604
        %vm621 = vmand %vm613, %vm605
        %vm622 = vmand %vm614, %vm606
        %vm623 = vmand %vm615, %vm607
        %vm624 = vmand %vm616, %vm608
        %v625 = vadd.s32 %v551, 8
        %v626 = vadd.s32 %v558, 8
        %v627 = vadd.s32 %v565, 8
        %v628 = vadd.s32 %v572, 8
        %v629 = vadd.s32 %v579, 8
        %v630 = vadd.s32 %v586, 8
        %v631 = vadd.s32 %v593, 8
        %v632 = vadd.s32 %v600, 8
        %v633 = vsel %vm617, %v625, %v551
        %v634 = vsel %vm618, %v626, %v558
        %v635 = vsel %vm619, %v627, %v565
        %v636 = vsel %vm620, %v628, %v572
        %v637 = vsel %vm621, %v629, %v579
        %v638 = vsel %vm622, %v630, %v586
        %v639 = vsel %vm623, %v631, %v593
        %v640 = vsel %vm624, %v632, %v600
        %v641 = vld [vmem:[#allocation2 + $0x7] sm:$0xff]
        %v642 = vld [vmem:[#allocation2 + $0xf] sm:$0xff]
        %v643 = vld [vmem:[#allocation2 + $0x17] sm:$0xff]
        %v644 = vld [vmem:[#allocation2 + $0x1f] sm:$0xff]
        %v645 = vld [vmem:[#allocation2 + $0x27] sm:$0xff]
        %v646 = vld [vmem:[#allocation2 + $0x2f] sm:$0xff]
        %v647 = vld [vmem:[#allocation2 + $0x37] sm:$0xff]
        %v648 = vld [vmem:[#allocation2 + $0x3f] sm:$0xff]
        %v649 = vadd.s32 %v633, 4294967295
        %v650 = vadd.s32 %v634, 4294967295
        %v651 = vadd.s32 %v635, 4294967295
        %v652 = vadd.s32 %v636, 4294967295
        %v653 = vadd.s32 %v637, 4294967295
        %v654 = vadd.s32 %v638, 4294967295
        %v655 = vadd.s32 %v639, 4294967295
        %v656 = vadd.s32 %v640, 4294967295
        %vm657 = vcmp.ge.s32.totalorder %v649, 0
        %vm658 = vcmp.ge.s32.totalorder %v650, 0
        %vm659 = vcmp.ge.s32.totalorder %v651, 0
        %vm660 = vcmp.ge.s32.totalorder %v652, 0
        %vm661 = vcmp.ge.s32.totalorder %v653, 0
        %vm662 = vcmp.ge.s32.totalorder %v654, 0
        %vm663 = vcmp.ge.s32.totalorder %v655, 0
        %vm664 = vcmp.ge.s32.totalorder %v656, 0
        %vm665 = vcmp.lt.s32.totalorder %v649, 8
        %vm666 = vcmp.lt.s32.totalorder %v650, 8
        %vm667 = vcmp.lt.s32.totalorder %v651, 8
        %vm668 = vcmp.lt.s32.totalorder %v652, 8
        %vm669 = vcmp.lt.s32.totalorder %v653, 8
        %vm670 = vcmp.lt.s32.totalorder %v654, 8
        %vm671 = vcmp.lt.s32.totalorder %v655, 8
        %vm672 = vcmp.lt.s32.totalorder %v656, 8
        %vm673 = vmand %vm657, %vm665
        %vm674 = vmand %vm658, %vm666
        %vm675 = vmand %vm659, %vm667
        %vm676 = vmand %vm660, %vm668
        %vm677 = vmand %vm661, %vm669
        %vm678 = vmand %vm662, %vm670
        %vm679 = vmand %vm663, %vm671
        %vm680 = vmand %vm664, %vm672
        %v681 = vsel %vm673, 1, 0
        %v682 = vsel %vm674, 1, 0
        %v683 = vsel %vm675, 1, 0
        %v684 = vsel %vm676, 1, 0
        %v685 = vsel %vm677, 1, 0
        %v686 = vsel %vm678, 1, 0
        %v687 = vsel %vm679, 1, 0
        %v688 = vsel %vm680, 1, 0
        %vm689 = vcmp.eq.s32.totalorder %v681, 1
        %vm690 = vcmp.eq.s32.totalorder %v682, 1
        %vm691 = vcmp.eq.s32.totalorder %v683, 1
        %vm692 = vcmp.eq.s32.totalorder %v684, 1
        %vm693 = vcmp.eq.s32.totalorder %v685, 1
        %vm694 = vcmp.eq.s32.totalorder %v686, 1
        %vm695 = vcmp.eq.s32.totalorder %v687, 1
        %vm696 = vcmp.eq.s32.totalorder %v688, 1
        %v697 = vsel %vm689, %v641, 0.0
        %v698 = vsel %vm690, %v642, 0.0
        %v699 = vsel %vm691, %v643, 0.0
        %v700 = vsel %vm692, %v644, 0.0
        %v701 = vsel %vm693, %v645, 0.0
        %v702 = vsel %vm694, %v646, 0.0
        %v703 = vsel %vm695, %v647, 0.0
        %v704 = vsel %vm696, %v648, 0.0
        %v705 = vpack.c.bf16 %v698, %v697
        %v706 = vpack.c.bf16 %v700, %v699
        %v707 = vpack.c.bf16 %v702, %v701
        %v708 = vpack.c.bf16 %v704, %v703
        %v709 = vld [vmem:[#allocation6] sm:$0xf]
        %v710 = vld [vmem:[#allocation6 + $0x4] sm:$0xf]
        %v711 = vld [vmem:[#allocation6 + $0x8] sm:$0xf]
        %v712 = vld [vmem:[#allocation6 + $0xc] sm:$0xf]
        %v713 = vld [vmem:[#allocation2 + $0x8] sm:$0xff]
        %v714 = vld [vmem:[#allocation2 + $0x10] sm:$0xff]
        %v715 = vld [vmem:[#allocation2 + $0x18] sm:$0xff]
        %v716 = vld [vmem:[#allocation2 + $0x20] sm:$0xff]
        %v717 = vld [vmem:[#allocation2 + $0x28] sm:$0xff]
        %v718 = vld [vmem:[#allocation2 + $0x30] sm:$0xff]
        %v719 = vld [vmem:[#allocation2 + $0x38] sm:$0xff]
        %v720 = vld [vmem:[#allocation2 + $0x40] sm:$0xff]
        %v721 = vpack.c.bf16 %v714, %v713
        %v722 = vpack.c.bf16 %v716, %v715
        %v723 = vpack.c.bf16 %v718, %v717
        %v724 = vpack.c.bf16 %v720, %v719
        %s725 = scalar_lea.vmem [#allocation6], 16
        %v726 = vld [vmem:[%s725] sm:$0xf]
        %v727 = vld [vmem:[%s725 + $0x4] sm:$0xf]
        %v728 = vld [vmem:[%s725 + $0x8] sm:$0xf]
        %v729 = vld [vmem:[%s725 + $0xc] sm:$0xf]
        %v734 = vunpack.c.l.b16 %v726
        %v735 = vunpack.c.l.b16 %v727
        %v736 = vunpack.c.l.b16 %v728
        %v737 = vunpack.c.l.b16 %v729
        %v738 = vpack.c.b16 %v735, %v734
        %v739 = vpack.c.b16 %v737, %v736
        %v743 = vsel %vm515, %v721, 0
        %v746 = vsel %vm515, %v722, 0
        %v749 = vsel %vm515, %v723, 0
        %v752 = vsel %vm515, %v724, 0
        %754 = vmatprep.subr.bf16.mxu0 0
        %755 = vmatpush1.bf16.msra.mxu0 0
        %756 = vmatprep.subr.bf16.mxu0 0
        %757 = vmatpush1.bf16.msra.mxu0 0
        %758 = vmatprep.subr.bf16.mxu0 0
        %759 = vmatpush1.bf16.msra.mxu0 0
        %760 = vmatprep.subr.bf16.mxu0 0
        %761 = vmatpush1.bf16.msra.mxu0 0
        %762 = vmatprep.subr.bf16.mxu0 0
        %763 = vmatpush1.bf16.msra.mxu0 0
        %764 = vmatprep.subr.bf16.mxu0 0
        %765 = vmatpush1.bf16.msra.mxu0 0
        %766 = vmatprep.subr.bf16.mxu0 0
        %767 = vmatpush1.bf16.msra.mxu0 %v739
        %768 = vmatprep.subr.bf16.mxu0 0
        %769 = vmatpush1.bf16.msra.mxu0 %v738
        %770 = vmatprep.subr.bf16.mxu0 0
        %771 = vmatpush2.bf16.msra.mxu0 0
        %772 = vmatprep.subr.bf16.mxu0 0
        %773 = vmatpush2.bf16.msra.mxu0 0
        %774 = vmatprep.subr.bf16.mxu0 0
        %775 = vmatpush2.bf16.msra.mxu0 0
        %776 = vmatprep.subr.bf16.mxu0 0
        %777 = vmatpush2.bf16.msra.mxu0 0
        %778 = vmatprep.subr.bf16.mxu0 0
        %779 = vmatpush2.bf16.msra.mxu0 0
        %780 = vmatprep.subr.bf16.mxu0 0
        %781 = vmatpush2.bf16.msra.mxu0 0
        %782 = vmatprep.subr.bf16.mxu0 0
        %783 = vmatpush2.bf16.msra.mxu0 0
        %784 = vmatprep.subr.bf16.mxu0 0
        %785 = vmatpush2.bf16.msra.mxu0 0
        %786 = vmatprep.mubr.bf16.mxu0 0
        %787 = vmatmul.mubr.bf16.gmra.mxu0 %v743
        %v788 = vpop.f32.mrf.mxu0
        %v789 = vadd.f32 0.0, %v788
        %v790 = vpop.f32.mrf.mxu0
        %v791 = vpop.f32.mrf.mxu0
        %v792 = vadd.f32 0.0, %v791
        %v793 = vpop.f32.mrf.mxu0
        %794 = vmatprep.mubr.bf16.mxu0 0
        %795 = vmatmul.mubr.bf16.gmra.mxu0 %v746
        %v796 = vpop.f32.mrf.mxu0
        %v797 = vadd.f32 0.0, %v796
        %v798 = vpop.f32.mrf.mxu0
        %v799 = vpop.f32.mrf.mxu0
        %v800 = vadd.f32 0.0, %v799
        %v801 = vpop.f32.mrf.mxu0
        %802 = vmatprep.mubr.bf16.mxu0 0
        %803 = vmatmul.mubr.bf16.gmra.mxu0 %v749
        %v804 = vpop.f32.mrf.mxu0
        %v805 = vadd.f32 0.0, %v804
        %v806 = vpop.f32.mrf.mxu0
        %v807 = vpop.f32.mrf.mxu0
        %v808 = vadd.f32 0.0, %v807
        %v809 = vpop.f32.mrf.mxu0
        %810 = vmatprep.mubr.bf16.mxu0 0
        %811 = vmatmul.mubr.bf16.gmra.mxu0 %v752
        %v812 = vpop.f32.mrf.mxu0
        %v813 = vadd.f32 0.0, %v812
        %v814 = vpop.f32.mrf.mxu0
        %v815 = vpop.f32.mrf.mxu0
        %v816 = vadd.f32 0.0, %v815
        %v817 = vpop.f32.mrf.mxu0
        %818 = vdwg.mxu0
        %v823 = vunpack.c.l.b16 %v709
        %v824 = vunpack.c.l.b16 %v710
        %v825 = vunpack.c.l.b16 %v711
        %v826 = vunpack.c.l.b16 %v712
        %v827 = vpack.c.b16 %v824, %v823
        %v828 = vpack.c.b16 %v826, %v825
        %v832 = vsel %vm515, %v705, 0
        %v835 = vsel %vm515, %v706, 0
        %v838 = vsel %vm515, %v707, 0
        %v841 = vsel %vm515, %v708, 0
        %843 = vmatprep.subr.bf16.mxu0 0
        %844 = vmatpush1.bf16.msra.mxu0 0
        %845 = vmatprep.subr.bf16.mxu0 0
        %846 = vmatpush1.bf16.msra.mxu0 0
        %847 = vmatprep.subr.bf16.mxu0 0
        %848 = vmatpush1.bf16.msra.mxu0 0
        %849 = vmatprep.subr.bf16.mxu0 0
        %850 = vmatpush1.bf16.msra.mxu0 0
        %851 = vmatprep.subr.bf16.mxu0 0
        %852 = vmatpush1.bf16.msra.mxu0 0
        %853 = vmatprep.subr.bf16.mxu0 0
        %854 = vmatpush1.bf16.msra.mxu0 0
        %855 = vmatprep.subr.bf16.mxu0 0
        %856 = vmatpush1.bf16.msra.mxu0 %v828
        %857 = vmatprep.subr.bf16.mxu0 0
        %858 = vmatpush1.bf16.msra.mxu0 %v827
        %859 = vmatprep.subr.bf16.mxu0 0
        %860 = vmatpush2.bf16.msra.mxu0 0
        %861 = vmatprep.subr.bf16.mxu0 0
        %862 = vmatpush2.bf16.msra.mxu0 0
        %863 = vmatprep.subr.bf16.mxu0 0
        %864 = vmatpush2.bf16.msra.mxu0 0
        %865 = vmatprep.subr.bf16.mxu0 0
        %866 = vmatpush2.bf16.msra.mxu0 0
        %867 = vmatprep.subr.bf16.mxu0 0
        %868 = vmatpush2.bf16.msra.mxu0 0
        %869 = vmatprep.subr.bf16.mxu0 0
        %870 = vmatpush2.bf16.msra.mxu0 0
        %871 = vmatprep.subr.bf16.mxu0 0
        %872 = vmatpush2.bf16.msra.mxu0 0
        %873 = vmatprep.subr.bf16.mxu0 0
        %874 = vmatpush2.bf16.msra.mxu0 0
        %875 = vmatprep.mubr.bf16.mxu0 0
        %876 = vmatmul.mubr.bf16.gmra.mxu0 %v832
        %v877 = vpop.f32.mrf.mxu0
        %v878 = vadd.f32 %v789, %v877
        %v879 = vpop.f32.mrf.mxu0
        %v880 = vpop.f32.mrf.mxu0
        %v881 = vadd.f32 %v792, %v880
        %v882 = vpop.f32.mrf.mxu0
        %883 = vmatprep.mubr.bf16.mxu0 0
        %884 = vmatmul.mubr.bf16.gmra.mxu0 %v835
        %v885 = vpop.f32.mrf.mxu0
        %v886 = vadd.f32 %v797, %v885
        %v887 = vpop.f32.mrf.mxu0
        %v888 = vpop.f32.mrf.mxu0
        %v889 = vadd.f32 %v800, %v888
        %v890 = vpop.f32.mrf.mxu0
        %891 = vmatprep.mubr.bf16.mxu0 0
        %892 = vmatmul.mubr.bf16.gmra.mxu0 %v838
        %v893 = vpop.f32.mrf.mxu0
        %v894 = vadd.f32 %v805, %v893
        %v895 = vpop.f32.mrf.mxu0
        %v896 = vpop.f32.mrf.mxu0
        %v897 = vadd.f32 %v808, %v896
        %v898 = vpop.f32.mrf.mxu0
        %899 = vmatprep.mubr.bf16.mxu0 0
        %900 = vmatmul.mubr.bf16.gmra.mxu0 %v841
        %v901 = vpop.f32.mrf.mxu0
        %v902 = vadd.f32 %v813, %v901
        %v903 = vpop.f32.mrf.mxu0
        %v904 = vpop.f32.mrf.mxu0
        %v905 = vadd.f32 %v816, %v904
        %v906 = vpop.f32.mrf.mxu0
        %907 = vdwg.mxu0
        %v908 = vld [vmem:[#allocation2 + $0x9] sm:$0xff]
        %v909 = vld [vmem:[#allocation2 + $0x11] sm:$0xff]
        %v910 = vld [vmem:[#allocation2 + $0x19] sm:$0xff]
        %v911 = vld [vmem:[#allocation2 + $0x21] sm:$0xff]
        %v912 = vld [vmem:[#allocation2 + $0x29] sm:$0xff]
        %v913 = vld [vmem:[#allocation2 + $0x31] sm:$0xff]
        %v914 = vld [vmem:[#allocation2 + $0x39] sm:$0xff]
        %v915 = vld [vmem:[#allocation2 + $0x41] sm:$0xff]
        %v916 = vadd.s32 %v633, 1
        %v917 = vadd.s32 %v634, 1
        %v918 = vadd.s32 %v635, 1
        %v919 = vadd.s32 %v636, 1
        %v920 = vadd.s32 %v637, 1
        %v921 = vadd.s32 %v638, 1
        %v922 = vadd.s32 %v639, 1
        %v923 = vadd.s32 %v640, 1
        %vm924 = vcmp.ge.s32.totalorder %v916, 0
        %vm925 = vcmp.ge.s32.totalorder %v917, 0
        %vm926 = vcmp.ge.s32.totalorder %v918, 0
        %vm927 = vcmp.ge.s32.totalorder %v919, 0
        %vm928 = vcmp.ge.s32.totalorder %v920, 0
        %vm929 = vcmp.ge.s32.totalorder %v921, 0
        %vm930 = vcmp.ge.s32.totalorder %v922, 0
        %vm931 = vcmp.ge.s32.totalorder %v923, 0
        %vm932 = vcmp.lt.s32.totalorder %v916, 8
        %vm933 = vcmp.lt.s32.totalorder %v917, 8
        %vm934 = vcmp.lt.s32.totalorder %v918, 8
        %vm935 = vcmp.lt.s32.totalorder %v919, 8
        %vm936 = vcmp.lt.s32.totalorder %v920, 8
        %vm937 = vcmp.lt.s32.totalorder %v921, 8
        %vm938 = vcmp.lt.s32.totalorder %v922, 8
        %vm939 = vcmp.lt.s32.totalorder %v923, 8
        %vm940 = vmand %vm924, %vm932
        %vm941 = vmand %vm925, %vm933
        %vm942 = vmand %vm926, %vm934
        %vm943 = vmand %vm927, %vm935
        %vm944 = vmand %vm928, %vm936
        %vm945 = vmand %vm929, %vm937
        %vm946 = vmand %vm930, %vm938
        %vm947 = vmand %vm931, %vm939
        %v948 = vsel %vm940, 1, 0
        %v949 = vsel %vm941, 1, 0
        %v950 = vsel %vm942, 1, 0
        %v951 = vsel %vm943, 1, 0
        %v952 = vsel %vm944, 1, 0
        %v953 = vsel %vm945, 1, 0
        %v954 = vsel %vm946, 1, 0
        %v955 = vsel %vm947, 1, 0
        %vm956 = vcmp.eq.s32.totalorder %v948, 1
        %vm957 = vcmp.eq.s32.totalorder %v949, 1
        %vm958 = vcmp.eq.s32.totalorder %v950, 1
        %vm959 = vcmp.eq.s32.totalorder %v951, 1
        %vm960 = vcmp.eq.s32.totalorder %v952, 1
        %vm961 = vcmp.eq.s32.totalorder %v953, 1
        %vm962 = vcmp.eq.s32.totalorder %v954, 1
        %vm963 = vcmp.eq.s32.totalorder %v955, 1
        %v964 = vsel %vm956, %v908, 0.0
        %v965 = vsel %vm957, %v909, 0.0
        %v966 = vsel %vm958, %v910, 0.0
        %v967 = vsel %vm959, %v911, 0.0
        %v968 = vsel %vm960, %v912, 0.0
        %v969 = vsel %vm961, %v913, 0.0
        %v970 = vsel %vm962, %v914, 0.0
        %v971 = vsel %vm963, %v915, 0.0
        %v972 = vpack.c.bf16 %v965, %v964
        %v973 = vpack.c.bf16 %v967, %v966
        %v974 = vpack.c.bf16 %v969, %v968
        %v975 = vpack.c.bf16 %v971, %v970
        %s976 = scalar_lea.vmem [#allocation6], 32
        %v977 = vld [vmem:[%s976] sm:$0xf]
        %v978 = vld [vmem:[%s976 + $0x4] sm:$0xf]
        %v979 = vld [vmem:[%s976 + $0x8] sm:$0xf]
        %v980 = vld [vmem:[%s976 + $0xc] sm:$0xf]
        %v985 = vunpack.c.l.b16 %v977
        %v986 = vunpack.c.l.b16 %v978
        %v987 = vunpack.c.l.b16 %v979
        %v988 = vunpack.c.l.b16 %v980
        %v989 = vpack.c.b16 %v986, %v985
        %v990 = vpack.c.b16 %v988, %v987
        %v994 = vsel %vm515, %v972, 0
        %v997 = vsel %vm515, %v973, 0
        %v1000 = vsel %vm515, %v974, 0
        %v1003 = vsel %vm515, %v975, 0
        %1005 = vmatprep.subr.bf16.mxu0 0
        %1006 = vmatpush1.bf16.msra.mxu0 0
        %1007 = vmatprep.subr.bf16.mxu0 0
        %1008 = vmatpush1.bf16.msra.mxu0 0
        %1009 = vmatprep.subr.bf16.mxu0 0
        %1010 = vmatpush1.bf16.msra.mxu0 0
        %1011 = vmatprep.subr.bf16.mxu0 0
        %1012 = vmatpush1.bf16.msra.mxu0 0
        %1013 = vmatprep.subr.bf16.mxu0 0
        %1014 = vmatpush1.bf16.msra.mxu0 0
        %1015 = vmatprep.subr.bf16.mxu0 0
        %1016 = vmatpush1.bf16.msra.mxu0 0
        %1017 = vmatprep.subr.bf16.mxu0 0
        %1018 = vmatpush1.bf16.msra.mxu0 %v990
        %1019 = vmatprep.subr.bf16.mxu0 0
        %1020 = vmatpush1.bf16.msra.mxu0 %v989
        %1021 = vmatprep.subr.bf16.mxu0 0
        %1022 = vmatpush2.bf16.msra.mxu0 0
        %1023 = vmatprep.subr.bf16.mxu0 0
        %1024 = vmatpush2.bf16.msra.mxu0 0
        %1025 = vmatprep.subr.bf16.mxu0 0
        %1026 = vmatpush2.bf16.msra.mxu0 0
        %1027 = vmatprep.subr.bf16.mxu0 0
        %1028 = vmatpush2.bf16.msra.mxu0 0
        %1029 = vmatprep.subr.bf16.mxu0 0
        %1030 = vmatpush2.bf16.msra.mxu0 0
        %1031 = vmatprep.subr.bf16.mxu0 0
        %1032 = vmatpush2.bf16.msra.mxu0 0
        %1033 = vmatprep.subr.bf16.mxu0 0
        %1034 = vmatpush2.bf16.msra.mxu0 0
        %1035 = vmatprep.subr.bf16.mxu0 0
        %1036 = vmatpush2.bf16.msra.mxu0 0
        %1037 = vmatprep.mubr.bf16.mxu0 0
        %1038 = vmatmul.mubr.bf16.gmra.mxu0 %v994
        %v1039 = vpop.f32.mrf.mxu0
        %v1040 = vadd.f32 0.0, %v1039
        %v1041 = vpop.f32.mrf.mxu0
        %v1042 = vpop.f32.mrf.mxu0
        %v1043 = vadd.f32 0.0, %v1042
        %v1044 = vpop.f32.mrf.mxu0
        %1045 = vmatprep.mubr.bf16.mxu0 0
        %1046 = vmatmul.mubr.bf16.gmra.mxu0 %v997
        %v1047 = vpop.f32.mrf.mxu0
        %v1048 = vadd.f32 0.0, %v1047
        %v1049 = vpop.f32.mrf.mxu0
        %v1050 = vpop.f32.mrf.mxu0
        %v1051 = vadd.f32 0.0, %v1050
        %v1052 = vpop.f32.mrf.mxu0
        %1053 = vmatprep.mubr.bf16.mxu0 0
        %1054 = vmatmul.mubr.bf16.gmra.mxu0 %v1000
        %v1055 = vpop.f32.mrf.mxu0
        %v1056 = vadd.f32 0.0, %v1055
        %v1057 = vpop.f32.mrf.mxu0
        %v1058 = vpop.f32.mrf.mxu0
        %v1059 = vadd.f32 0.0, %v1058
        %v1060 = vpop.f32.mrf.mxu0
        %1061 = vmatprep.mubr.bf16.mxu0 0
        %1062 = vmatmul.mubr.bf16.gmra.mxu0 %v1003
        %v1063 = vpop.f32.mrf.mxu0
        %v1064 = vadd.f32 0.0, %v1063
        %v1065 = vpop.f32.mrf.mxu0
        %v1066 = vpop.f32.mrf.mxu0
        %v1067 = vadd.f32 0.0, %v1066
        %v1068 = vpop.f32.mrf.mxu0
        %1069 = vdwg.mxu0
        %v1070 = vadd.f32 %v878, %v1040
        %v1071 = vadd.f32 %v881, %v1043
        %v1072 = vadd.f32 %v886, %v1048
        %v1073 = vadd.f32 %v889, %v1051
        %v1074 = vadd.f32 %v894, %v1056
        %v1075 = vadd.f32 %v897, %v1059
        %v1076 = vadd.f32 %v902, %v1064
        %v1077 = vadd.f32 %v905, %v1067
        %v1078 = vld [vmem:[#allocation2 + $0xf] sm:$0xff]
        %v1079 = vld [vmem:[#allocation2 + $0x17] sm:$0xff]
        %v1080 = vld [vmem:[#allocation2 + $0x1f] sm:$0xff]
        %v1081 = vld [vmem:[#allocation2 + $0x27] sm:$0xff]
        %v1082 = vld [vmem:[#allocation2 + $0x2f] sm:$0xff]
        %v1083 = vld [vmem:[#allocation2 + $0x37] sm:$0xff]
        %v1084 = vld [vmem:[#allocation2 + $0x3f] sm:$0xff]
        %v1085 = vld [vmem:[#allocation2 + $0x47] sm:$0xff]
        %v1086 = vsel %vm689, %v1078, 0.0
        %v1087 = vsel %vm690, %v1079, 0.0
        %v1088 = vsel %vm691, %v1080, 0.0
        %v1089 = vsel %vm692, %v1081, 0.0
        %v1090 = vsel %vm693, %v1082, 0.0
        %v1091 = vsel %vm694, %v1083, 0.0
        %v1092 = vsel %vm695, %v1084, 0.0
        %v1093 = vsel %vm696, %v1085, 0.0
        %v1094 = vpack.c.bf16 %v1087, %v1086
        %v1095 = vpack.c.bf16 %v1089, %v1088
        %v1096 = vpack.c.bf16 %v1091, %v1090
        %v1097 = vpack.c.bf16 %v1093, %v1092
        %s1098 = scalar_lea.vmem [#allocation6], 48
        %v1099 = vld [vmem:[%s1098] sm:$0xf]
        %v1100 = vld [vmem:[%s1098 + $0x4] sm:$0xf]
        %v1101 = vld [vmem:[%s1098 + $0x8] sm:$0xf]
        %v1102 = vld [vmem:[%s1098 + $0xc] sm:$0xf]
        %v1107 = vunpack.c.l.b16 %v1099
        %v1108 = vunpack.c.l.b16 %v1100
        %v1109 = vunpack.c.l.b16 %v1101
        %v1110 = vunpack.c.l.b16 %v1102
        %v1111 = vpack.c.b16 %v1108, %v1107
        %v1112 = vpack.c.b16 %v1110, %v1109
        %v1116 = vsel %vm515, %v1094, 0
        %v1119 = vsel %vm515, %v1095, 0
        %v1122 = vsel %vm515, %v1096, 0
        %v1125 = vsel %vm515, %v1097, 0
        %1127 = vmatprep.subr.bf16.mxu0 0
        %1128 = vmatpush1.bf16.msra.mxu0 0
        %1129 = vmatprep.subr.bf16.mxu0 0
        %1130 = vmatpush1.bf16.msra.mxu0 0
        %1131 = vmatprep.subr.bf16.mxu0 0
        %1132 = vmatpush1.bf16.msra.mxu0 0
        %1133 = vmatprep.subr.bf16.mxu0 0
        %1134 = vmatpush1.bf16.msra.mxu0 0
        %1135 = vmatprep.subr.bf16.mxu0 0
        %1136 = vmatpush1.bf16.msra.mxu0 0
        %1137 = vmatprep.subr.bf16.mxu0 0
        %1138 = vmatpush1.bf16.msra.mxu0 0
        %1139 = vmatprep.subr.bf16.mxu0 0
        %1140 = vmatpush1.bf16.msra.mxu0 %v1112
        %1141 = vmatprep.subr.bf16.mxu0 0
        %1142 = vmatpush1.bf16.msra.mxu0 %v1111
        %1143 = vmatprep.subr.bf16.mxu0 0
        %1144 = vmatpush2.bf16.msra.mxu0 0
        %1145 = vmatprep.subr.bf16.mxu0 0
        %1146 = vmatpush2.bf16.msra.mxu0 0
        %1147 = vmatprep.subr.bf16.mxu0 0
        %1148 = vmatpush2.bf16.msra.mxu0 0
        %1149 = vmatprep.subr.bf16.mxu0 0
        %1150 = vmatpush2.bf16.msra.mxu0 0
        %1151 = vmatprep.subr.bf16.mxu0 0
        %1152 = vmatpush2.bf16.msra.mxu0 0
        %1153 = vmatprep.subr.bf16.mxu0 0
        %1154 = vmatpush2.bf16.msra.mxu0 0
        %1155 = vmatprep.subr.bf16.mxu0 0
        %1156 = vmatpush2.bf16.msra.mxu0 0
        %1157 = vmatprep.subr.bf16.mxu0 0
        %1158 = vmatpush2.bf16.msra.mxu0 0
        %1159 = vmatprep.mubr.bf16.mxu0 0
        %1160 = vmatmul.mubr.bf16.gmra.mxu0 %v1116
        %v1161 = vpop.f32.mrf.mxu0
        %v1162 = vadd.f32 0.0, %v1161
        %v1163 = vpop.f32.mrf.mxu0
        %v1164 = vpop.f32.mrf.mxu0
        %v1165 = vadd.f32 0.0, %v1164
        %v1166 = vpop.f32.mrf.mxu0
        %1167 = vmatprep.mubr.bf16.mxu0 0
        %1168 = vmatmul.mubr.bf16.gmra.mxu0 %v1119
        %v1169 = vpop.f32.mrf.mxu0
        %v1170 = vadd.f32 0.0, %v1169
        %v1171 = vpop.f32.mrf.mxu0
        %v1172 = vpop.f32.mrf.mxu0
        %v1173 = vadd.f32 0.0, %v1172
        %v1174 = vpop.f32.mrf.mxu0
        %1175 = vmatprep.mubr.bf16.mxu0 0
        %1176 = vmatmul.mubr.bf16.gmra.mxu0 %v1122
        %v1177 = vpop.f32.mrf.mxu0
        %v1178 = vadd.f32 0.0, %v1177
        %v1179 = vpop.f32.mrf.mxu0
        %v1180 = vpop.f32.mrf.mxu0
        %v1181 = vadd.f32 0.0, %v1180
        %v1182 = vpop.f32.mrf.mxu0
        %1183 = vmatprep.mubr.bf16.mxu0 0
        %1184 = vmatmul.mubr.bf16.gmra.mxu0 %v1125
        %v1185 = vpop.f32.mrf.mxu0
        %v1186 = vadd.f32 0.0, %v1185
        %v1187 = vpop.f32.mrf.mxu0
        %v1188 = vpop.f32.mrf.mxu0
        %v1189 = vadd.f32 0.0, %v1188
        %v1190 = vpop.f32.mrf.mxu0
        %1191 = vdwg.mxu0
        %v1192 = vadd.f32 %v1070, %v1162
        %v1193 = vadd.f32 %v1071, %v1165
        %v1194 = vadd.f32 %v1072, %v1170
        %v1195 = vadd.f32 %v1073, %v1173
        %v1196 = vadd.f32 %v1074, %v1178
        %v1197 = vadd.f32 %v1075, %v1181
        %v1198 = vadd.f32 %v1076, %v1186
        %v1199 = vadd.f32 %v1077, %v1189
        %v1200 = vld [vmem:[#allocation2 + $0x10] sm:$0xff]
        %v1201 = vld [vmem:[#allocation2 + $0x18] sm:$0xff]
        %v1202 = vld [vmem:[#allocation2 + $0x20] sm:$0xff]
        %v1203 = vld [vmem:[#allocation2 + $0x28] sm:$0xff]
        %v1204 = vld [vmem:[#allocation2 + $0x30] sm:$0xff]
        %v1205 = vld [vmem:[#allocation2 + $0x38] sm:$0xff]
        %v1206 = vld [vmem:[#allocation2 + $0x40] sm:$0xff]
        %v1207 = vld [vmem:[#allocation2 + $0x48] sm:$0xff]
        %v1208 = vpack.c.bf16 %v1201, %v1200
        %v1209 = vpack.c.bf16 %v1203, %v1202
        %v1210 = vpack.c.bf16 %v1205, %v1204
        %v1211 = vpack.c.bf16 %v1207, %v1206
        %s1212 = scalar_lea.vmem [#allocation6], 64
        %v1213 = vld [vmem:[%s1212] sm:$0xf]
        %v1214 = vld [vmem:[%s1212 + $0x4] sm:$0xf]
        %v1215 = vld [vmem:[%s1212 + $0x8] sm:$0xf]
        %v1216 = vld [vmem:[%s1212 + $0xc] sm:$0xf]
        %v1221 = vunpack.c.l.b16 %v1213
        %v1222 = vunpack.c.l.b16 %v1214
        %v1223 = vunpack.c.l.b16 %v1215
        %v1224 = vunpack.c.l.b16 %v1216
        %v1225 = vpack.c.b16 %v1222, %v1221
        %v1226 = vpack.c.b16 %v1224, %v1223
        %v1230 = vsel %vm515, %v1208, 0
        %v1233 = vsel %vm515, %v1209, 0
        %v1236 = vsel %vm515, %v1210, 0
        %v1239 = vsel %vm515, %v1211, 0
        %1241 = vmatprep.subr.bf16.mxu0 0
        %1242 = vmatpush1.bf16.msra.mxu0 0
        %1243 = vmatprep.subr.bf16.mxu0 0
        %1244 = vmatpush1.bf16.msra.mxu0 0
        %1245 = vmatprep.subr.bf16.mxu0 0
        %1246 = vmatpush1.bf16.msra.mxu0 0
        %1247 = vmatprep.subr.bf16.mxu0 0
        %1248 = vmatpush1.bf16.msra.mxu0 0
        %1249 = vmatprep.subr.bf16.mxu0 0
        %1250 = vmatpush1.bf16.msra.mxu0 0
        %1251 = vmatprep.subr.bf16.mxu0 0
        %1252 = vmatpush1.bf16.msra.mxu0 0
        %1253 = vmatprep.subr.bf16.mxu0 0
        %1254 = vmatpush1.bf16.msra.mxu0 %v1226
        %1255 = vmatprep.subr.bf16.mxu0 0
        %1256 = vmatpush1.bf16.msra.mxu0 %v1225
        %1257 = vmatprep.subr.bf16.mxu0 0
        %1258 = vmatpush2.bf16.msra.mxu0 0
        %1259 = vmatprep.subr.bf16.mxu0 0
        %1260 = vmatpush2.bf16.msra.mxu0 0
        %1261 = vmatprep.subr.bf16.mxu0 0
        %1262 = vmatpush2.bf16.msra.mxu0 0
        %1263 = vmatprep.subr.bf16.mxu0 0
        %1264 = vmatpush2.bf16.msra.mxu0 0
        %1265 = vmatprep.subr.bf16.mxu0 0
        %1266 = vmatpush2.bf16.msra.mxu0 0
        %1267 = vmatprep.subr.bf16.mxu0 0
        %1268 = vmatpush2.bf16.msra.mxu0 0
        %1269 = vmatprep.subr.bf16.mxu0 0
        %1270 = vmatpush2.bf16.msra.mxu0 0
        %1271 = vmatprep.subr.bf16.mxu0 0
        %1272 = vmatpush2.bf16.msra.mxu0 0
        %1273 = vmatprep.mubr.bf16.mxu0 0
        %1274 = vmatmul.mubr.bf16.gmra.mxu0 %v1230
        %v1275 = vpop.f32.mrf.mxu0
        %v1276 = vadd.f32 0.0, %v1275
        %v1277 = vpop.f32.mrf.mxu0
        %v1278 = vpop.f32.mrf.mxu0
        %v1279 = vadd.f32 0.0, %v1278
        %v1280 = vpop.f32.mrf.mxu0
        %1281 = vmatprep.mubr.bf16.mxu0 0
        %1282 = vmatmul.mubr.bf16.gmra.mxu0 %v1233
        %v1283 = vpop.f32.mrf.mxu0
        %v1284 = vadd.f32 0.0, %v1283
        %v1285 = vpop.f32.mrf.mxu0
        %v1286 = vpop.f32.mrf.mxu0
        %v1287 = vadd.f32 0.0, %v1286
        %v1288 = vpop.f32.mrf.mxu0
        %1289 = vmatprep.mubr.bf16.mxu0 0
        %1290 = vmatmul.mubr.bf16.gmra.mxu0 %v1236
        %v1291 = vpop.f32.mrf.mxu0
        %v1292 = vadd.f32 0.0, %v1291
        %v1293 = vpop.f32.mrf.mxu0
        %v1294 = vpop.f32.mrf.mxu0
        %v1295 = vadd.f32 0.0, %v1294
        %v1296 = vpop.f32.mrf.mxu0
        %1297 = vmatprep.mubr.bf16.mxu0 0
        %1298 = vmatmul.mubr.bf16.gmra.mxu0 %v1239
        %v1299 = vpop.f32.mrf.mxu0
        %v1300 = vadd.f32 0.0, %v1299
        %v1301 = vpop.f32.mrf.mxu0
        %v1302 = vpop.f32.mrf.mxu0
        %v1303 = vadd.f32 0.0, %v1302
        %v1304 = vpop.f32.mrf.mxu0
        %1305 = vdwg.mxu0
        %v1306 = vadd.f32 %v1192, %v1276
        %v1307 = vadd.f32 %v1193, %v1279
        %v1308 = vadd.f32 %v1194, %v1284
        %v1309 = vadd.f32 %v1195, %v1287
        %v1310 = vadd.f32 %v1196, %v1292
        %v1311 = vadd.f32 %v1197, %v1295
        %v1312 = vadd.f32 %v1198, %v1300
        %v1313 = vadd.f32 %v1199, %v1303
        %v1314 = vld [vmem:[#allocation2 + $0x11] sm:$0xff]
        %v1315 = vld [vmem:[#allocation2 + $0x19] sm:$0xff]
        %v1316 = vld [vmem:[#allocation2 + $0x21] sm:$0xff]
        %v1317 = vld [vmem:[#allocation2 + $0x29] sm:$0xff]
        %v1318 = vld [vmem:[#allocation2 + $0x31] sm:$0xff]
        %v1319 = vld [vmem:[#allocation2 + $0x39] sm:$0xff]
        %v1320 = vld [vmem:[#allocation2 + $0x41] sm:$0xff]
        %v1321 = vld [vmem:[#allocation2 + $0x49] sm:$0xff]
        %v1322 = vsel %vm956, %v1314, 0.0
        %v1323 = vsel %vm957, %v1315, 0.0
        %v1324 = vsel %vm958, %v1316, 0.0
        %v1325 = vsel %vm959, %v1317, 0.0
        %v1326 = vsel %vm960, %v1318, 0.0
        %v1327 = vsel %vm961, %v1319, 0.0
        %v1328 = vsel %vm962, %v1320, 0.0
        %v1329 = vsel %vm963, %v1321, 0.0
        %v1330 = vpack.c.bf16 %v1323, %v1322
        %v1331 = vpack.c.bf16 %v1325, %v1324
        %v1332 = vpack.c.bf16 %v1327, %v1326
        %v1333 = vpack.c.bf16 %v1329, %v1328
        %s1334 = scalar_lea.vmem [#allocation6], 80
        %v1335 = vld [vmem:[%s1334] sm:$0xf]
        %v1336 = vld [vmem:[%s1334 + $0x4] sm:$0xf]
        %v1337 = vld [vmem:[%s1334 + $0x8] sm:$0xf]
        %v1338 = vld [vmem:[%s1334 + $0xc] sm:$0xf]
        %v1343 = vunpack.c.l.b16 %v1335
        %v1344 = vunpack.c.l.b16 %v1336
        %v1345 = vunpack.c.l.b16 %v1337
        %v1346 = vunpack.c.l.b16 %v1338
        %v1347 = vpack.c.b16 %v1344, %v1343
        %v1348 = vpack.c.b16 %v1346, %v1345
        %v1352 = vsel %vm515, %v1330, 0
        %v1355 = vsel %vm515, %v1331, 0
        %v1358 = vsel %vm515, %v1332, 0
        %v1361 = vsel %vm515, %v1333, 0
        %1363 = vmatprep.subr.bf16.mxu0 0
        %1364 = vmatpush1.bf16.msra.mxu0 0
        %1365 = vmatprep.subr.bf16.mxu0 0
        %1366 = vmatpush1.bf16.msra.mxu0 0
        %1367 = vmatprep.subr.bf16.mxu0 0
        %1368 = vmatpush1.bf16.msra.mxu0 0
        %1369 = vmatprep.subr.bf16.mxu0 0
        %1370 = vmatpush1.bf16.msra.mxu0 0
        %1371 = vmatprep.subr.bf16.mxu0 0
        %1372 = vmatpush1.bf16.msra.mxu0 0
        %1373 = vmatprep.subr.bf16.mxu0 0
        %1374 = vmatpush1.bf16.msra.mxu0 0
        %1375 = vmatprep.subr.bf16.mxu0 0
        %1376 = vmatpush1.bf16.msra.mxu0 %v1348
        %1377 = vmatprep.subr.bf16.mxu0 0
        %1378 = vmatpush1.bf16.msra.mxu0 %v1347
        %1379 = vmatprep.subr.bf16.mxu0 0
        %1380 = vmatpush2.bf16.msra.mxu0 0
        %1381 = vmatprep.subr.bf16.mxu0 0
        %1382 = vmatpush2.bf16.msra.mxu0 0
        %1383 = vmatprep.subr.bf16.mxu0 0
        %1384 = vmatpush2.bf16.msra.mxu0 0
        %1385 = vmatprep.subr.bf16.mxu0 0
        %1386 = vmatpush2.bf16.msra.mxu0 0
        %1387 = vmatprep.subr.bf16.mxu0 0
        %1388 = vmatpush2.bf16.msra.mxu0 0
        %1389 = vmatprep.subr.bf16.mxu0 0
        %1390 = vmatpush2.bf16.msra.mxu0 0
        %1391 = vmatprep.subr.bf16.mxu0 0
        %1392 = vmatpush2.bf16.msra.mxu0 0
        %1393 = vmatprep.subr.bf16.mxu0 0
        %1394 = vmatpush2.bf16.msra.mxu0 0
        %1395 = vmatprep.mubr.bf16.mxu0 0
        %1396 = vmatmul.mubr.bf16.gmra.mxu0 %v1352
        %v1397 = vpop.f32.mrf.mxu0
        %v1398 = vadd.f32 0.0, %v1397
        %v1399 = vpop.f32.mrf.mxu0
        %v1400 = vpop.f32.mrf.mxu0
        %v1401 = vadd.f32 0.0, %v1400
        %v1402 = vpop.f32.mrf.mxu0
        %1403 = vmatprep.mubr.bf16.mxu0 0
        %1404 = vmatmul.mubr.bf16.gmra.mxu0 %v1355
        %v1405 = vpop.f32.mrf.mxu0
        %v1406 = vadd.f32 0.0, %v1405
        %v1407 = vpop.f32.mrf.mxu0
        %v1408 = vpop.f32.mrf.mxu0
        %v1409 = vadd.f32 0.0, %v1408
        %v1410 = vpop.f32.mrf.mxu0
        %1411 = vmatprep.mubr.bf16.mxu0 0
        %1412 = vmatmul.mubr.bf16.gmra.mxu0 %v1358
        %v1413 = vpop.f32.mrf.mxu0
        %v1414 = vadd.f32 0.0, %v1413
        %v1415 = vpop.f32.mrf.mxu0
        %v1416 = vpop.f32.mrf.mxu0
        %v1417 = vadd.f32 0.0, %v1416
        %v1418 = vpop.f32.mrf.mxu0
        %1419 = vmatprep.mubr.bf16.mxu0 0
        %1420 = vmatmul.mubr.bf16.gmra.mxu0 %v1361
        %v1421 = vpop.f32.mrf.mxu0
        %v1422 = vadd.f32 0.0, %v1421
        %v1423 = vpop.f32.mrf.mxu0
        %v1424 = vpop.f32.mrf.mxu0
        %v1425 = vadd.f32 0.0, %v1424
        %v1426 = vpop.f32.mrf.mxu0
        %1427 = vdwg.mxu0
        %v1428 = vadd.f32 %v1306, %v1398
        %v1429 = vadd.f32 %v1307, %v1401
        %v1430 = vadd.f32 %v1308, %v1406
        %v1431 = vadd.f32 %v1309, %v1409
        %v1432 = vadd.f32 %v1310, %v1414
        %v1433 = vadd.f32 %v1311, %v1417
        %v1434 = vadd.f32 %v1312, %v1422
        %v1435 = vadd.f32 %v1313, %v1425
        %v1436 = vld [vmem:[#allocation2 + $0x17] sm:$0xff]
        %v1437 = vld [vmem:[#allocation2 + $0x1f] sm:$0xff]
        %v1438 = vld [vmem:[#allocation2 + $0x27] sm:$0xff]
        %v1439 = vld [vmem:[#allocation2 + $0x2f] sm:$0xff]
        %v1440 = vld [vmem:[#allocation2 + $0x37] sm:$0xff]
        %v1441 = vld [vmem:[#allocation2 + $0x3f] sm:$0xff]
        %v1442 = vld [vmem:[#allocation2 + $0x47] sm:$0xff]
        %v1443 = vld [vmem:[#allocation2 + $0x4f] sm:$0xff]
        %v1444 = vsel %vm689, %v1436, 0.0
        %v1445 = vsel %vm690, %v1437, 0.0
        %v1446 = vsel %vm691, %v1438, 0.0
        %v1447 = vsel %vm692, %v1439, 0.0
        %v1448 = vsel %vm693, %v1440, 0.0
        %v1449 = vsel %vm694, %v1441, 0.0
        %v1450 = vsel %vm695, %v1442, 0.0
        %v1451 = vsel %vm696, %v1443, 0.0
        %v1452 = vpack.c.bf16 %v1445, %v1444
        %v1453 = vpack.c.bf16 %v1447, %v1446
        %v1454 = vpack.c.bf16 %v1449, %v1448
        %v1455 = vpack.c.bf16 %v1451, %v1450
        %s1456 = scalar_lea.vmem [#allocation6], 96
        %v1457 = vld [vmem:[%s1456] sm:$0xf]
        %v1458 = vld [vmem:[%s1456 + $0x4] sm:$0xf]
        %v1459 = vld [vmem:[%s1456 + $0x8] sm:$0xf]
        %v1460 = vld [vmem:[%s1456 + $0xc] sm:$0xf]
        %v1465 = vunpack.c.l.b16 %v1457
        %v1466 = vunpack.c.l.b16 %v1458
        %v1467 = vunpack.c.l.b16 %v1459
        %v1468 = vunpack.c.l.b16 %v1460
        %v1469 = vpack.c.b16 %v1466, %v1465
        %v1470 = vpack.c.b16 %v1468, %v1467
        %v1474 = vsel %vm515, %v1452, 0
        %v1477 = vsel %vm515, %v1453, 0
        %v1480 = vsel %vm515, %v1454, 0
        %v1483 = vsel %vm515, %v1455, 0
        %1485 = vmatprep.subr.bf16.mxu0 0
        %1486 = vmatpush1.bf16.msra.mxu0 0
        %1487 = vmatprep.subr.bf16.mxu0 0
        %1488 = vmatpush1.bf16.msra.mxu0 0
        %1489 = vmatprep.subr.bf16.mxu0 0
        %1490 = vmatpush1.bf16.msra.mxu0 0
        %1491 = vmatprep.subr.bf16.mxu0 0
        %1492 = vmatpush1.bf16.msra.mxu0 0
        %1493 = vmatprep.subr.bf16.mxu0 0
        %1494 = vmatpush1.bf16.msra.mxu0 0
        %1495 = vmatprep.subr.bf16.mxu0 0
        %1496 = vmatpush1.bf16.msra.mxu0 0
        %1497 = vmatprep.subr.bf16.mxu0 0
        %1498 = vmatpush1.bf16.msra.mxu0 %v1470
        %1499 = vmatprep.subr.bf16.mxu0 0
        %1500 = vmatpush1.bf16.msra.mxu0 %v1469
        %1501 = vmatprep.subr.bf16.mxu0 0
        %1502 = vmatpush2.bf16.msra.mxu0 0
        %1503 = vmatprep.subr.bf16.mxu0 0
        %1504 = vmatpush2.bf16.msra.mxu0 0
        %1505 = vmatprep.subr.bf16.mxu0 0
        %1506 = vmatpush2.bf16.msra.mxu0 0
        %1507 = vmatprep.subr.bf16.mxu0 0
        %1508 = vmatpush2.bf16.msra.mxu0 0
        %1509 = vmatprep.subr.bf16.mxu0 0
        %1510 = vmatpush2.bf16.msra.mxu0 0
        %1511 = vmatprep.subr.bf16.mxu0 0
        %1512 = vmatpush2.bf16.msra.mxu0 0
        %1513 = vmatprep.subr.bf16.mxu0 0
        %1514 = vmatpush2.bf16.msra.mxu0 0
        %1515 = vmatprep.subr.bf16.mxu0 0
        %1516 = vmatpush2.bf16.msra.mxu0 0
        %1517 = vmatprep.mubr.bf16.mxu0 0
        %1518 = vmatmul.mubr.bf16.gmra.mxu0 %v1474
        %v1519 = vpop.f32.mrf.mxu0
        %v1520 = vadd.f32 0.0, %v1519
        %v1521 = vpop.f32.mrf.mxu0
        %v1522 = vpop.f32.mrf.mxu0
        %v1523 = vadd.f32 0.0, %v1522
        %v1524 = vpop.f32.mrf.mxu0
        %1525 = vmatprep.mubr.bf16.mxu0 0
        %1526 = vmatmul.mubr.bf16.gmra.mxu0 %v1477
        %v1527 = vpop.f32.mrf.mxu0
        %v1528 = vadd.f32 0.0, %v1527
        %v1529 = vpop.f32.mrf.mxu0
        %v1530 = vpop.f32.mrf.mxu0
        %v1531 = vadd.f32 0.0, %v1530
        %v1532 = vpop.f32.mrf.mxu0
        %1533 = vmatprep.mubr.bf16.mxu0 0
        %1534 = vmatmul.mubr.bf16.gmra.mxu0 %v1480
        %v1535 = vpop.f32.mrf.mxu0
        %v1536 = vadd.f32 0.0, %v1535
        %v1537 = vpop.f32.mrf.mxu0
        %v1538 = vpop.f32.mrf.mxu0
        %v1539 = vadd.f32 0.0, %v1538
        %v1540 = vpop.f32.mrf.mxu0
        %1541 = vmatprep.mubr.bf16.mxu0 0
        %1542 = vmatmul.mubr.bf16.gmra.mxu0 %v1483
        %v1543 = vpop.f32.mrf.mxu0
        %v1544 = vadd.f32 0.0, %v1543
        %v1545 = vpop.f32.mrf.mxu0
        %v1546 = vpop.f32.mrf.mxu0
        %v1547 = vadd.f32 0.0, %v1546
        %v1548 = vpop.f32.mrf.mxu0
        %1549 = vdwg.mxu0
        %v1550 = vadd.f32 %v1428, %v1520
        %v1551 = vadd.f32 %v1429, %v1523
        %v1552 = vadd.f32 %v1430, %v1528
        %v1553 = vadd.f32 %v1431, %v1531
        %v1554 = vadd.f32 %v1432, %v1536
        %v1555 = vadd.f32 %v1433, %v1539
        %v1556 = vadd.f32 %v1434, %v1544
        %v1557 = vadd.f32 %v1435, %v1547
        %v1558 = vld [vmem:[#allocation2 + $0x18] sm:$0xff]
        %v1559 = vld [vmem:[#allocation2 + $0x20] sm:$0xff]
        %v1560 = vld [vmem:[#allocation2 + $0x28] sm:$0xff]
        %v1561 = vld [vmem:[#allocation2 + $0x30] sm:$0xff]
        %v1562 = vld [vmem:[#allocation2 + $0x38] sm:$0xff]
        %v1563 = vld [vmem:[#allocation2 + $0x40] sm:$0xff]
        %v1564 = vld [vmem:[#allocation2 + $0x48] sm:$0xff]
        %v1565 = vld [vmem:[#allocation2 + $0x50] sm:$0xff]
        %v1566 = vpack.c.bf16 %v1559, %v1558
        %v1567 = vpack.c.bf16 %v1561, %v1560
        %v1568 = vpack.c.bf16 %v1563, %v1562
        %v1569 = vpack.c.bf16 %v1565, %v1564
        %s1570 = scalar_lea.vmem [#allocation6], 112
        %v1571 = vld [vmem:[%s1570] sm:$0xf]
        %v1572 = vld [vmem:[%s1570 + $0x4] sm:$0xf]
        %v1573 = vld [vmem:[%s1570 + $0x8] sm:$0xf]
        %v1574 = vld [vmem:[%s1570 + $0xc] sm:$0xf]
        %v1579 = vunpack.c.l.b16 %v1571
        %v1580 = vunpack.c.l.b16 %v1572
        %v1581 = vunpack.c.l.b16 %v1573
        %v1582 = vunpack.c.l.b16 %v1574
        %v1583 = vpack.c.b16 %v1580, %v1579
        %v1584 = vpack.c.b16 %v1582, %v1581
        %v1588 = vsel %vm515, %v1566, 0
        %v1591 = vsel %vm515, %v1567, 0
        %v1594 = vsel %vm515, %v1568, 0
        %v1597 = vsel %vm515, %v1569, 0
        %1599 = vmatprep.subr.bf16.mxu0 0
        %1600 = vmatpush1.bf16.msra.mxu0 0
        %1601 = vmatprep.subr.bf16.mxu0 0
        %1602 = vmatpush1.bf16.msra.mxu0 0
        %1603 = vmatprep.subr.bf16.mxu0 0
        %1604 = vmatpush1.bf16.msra.mxu0 0
        %1605 = vmatprep.subr.bf16.mxu0 0
        %1606 = vmatpush1.bf16.msra.mxu0 0
        %1607 = vmatprep.subr.bf16.mxu0 0
        %1608 = vmatpush1.bf16.msra.mxu0 0
        %1609 = vmatprep.subr.bf16.mxu0 0
        %1610 = vmatpush1.bf16.msra.mxu0 0
        %1611 = vmatprep.subr.bf16.mxu0 0
        %1612 = vmatpush1.bf16.msra.mxu0 %v1584
        %1613 = vmatprep.subr.bf16.mxu0 0
        %1614 = vmatpush1.bf16.msra.mxu0 %v1583
        %1615 = vmatprep.subr.bf16.mxu0 0
        %1616 = vmatpush2.bf16.msra.mxu0 0
        %1617 = vmatprep.subr.bf16.mxu0 0
        %1618 = vmatpush2.bf16.msra.mxu0 0
        %1619 = vmatprep.subr.bf16.mxu0 0
        %1620 = vmatpush2.bf16.msra.mxu0 0
        %1621 = vmatprep.subr.bf16.mxu0 0
        %1622 = vmatpush2.bf16.msra.mxu0 0
        %1623 = vmatprep.subr.bf16.mxu0 0
        %1624 = vmatpush2.bf16.msra.mxu0 0
        %1625 = vmatprep.subr.bf16.mxu0 0
        %1626 = vmatpush2.bf16.msra.mxu0 0
        %1627 = vmatprep.subr.bf16.mxu0 0
        %1628 = vmatpush2.bf16.msra.mxu0 0
        %1629 = vmatprep.subr.bf16.mxu0 0
        %1630 = vmatpush2.bf16.msra.mxu0 0
        %1631 = vmatprep.mubr.bf16.mxu0 0
        %1632 = vmatmul.mubr.bf16.gmra.mxu0 %v1588
        %v1633 = vpop.f32.mrf.mxu0
        %v1634 = vadd.f32 0.0, %v1633
        %v1635 = vpop.f32.mrf.mxu0
        %v1636 = vpop.f32.mrf.mxu0
        %v1637 = vadd.f32 0.0, %v1636
        %v1638 = vpop.f32.mrf.mxu0
        %1639 = vmatprep.mubr.bf16.mxu0 0
        %1640 = vmatmul.mubr.bf16.gmra.mxu0 %v1591
        %v1641 = vpop.f32.mrf.mxu0
        %v1642 = vadd.f32 0.0, %v1641
        %v1643 = vpop.f32.mrf.mxu0
        %v1644 = vpop.f32.mrf.mxu0
        %v1645 = vadd.f32 0.0, %v1644
        %v1646 = vpop.f32.mrf.mxu0
        %1647 = vmatprep.mubr.bf16.mxu0 0
        %1648 = vmatmul.mubr.bf16.gmra.mxu0 %v1594
        %v1649 = vpop.f32.mrf.mxu0
        %v1650 = vadd.f32 0.0, %v1649
        %v1651 = vpop.f32.mrf.mxu0
        %v1652 = vpop.f32.mrf.mxu0
        %v1653 = vadd.f32 0.0, %v1652
        %v1654 = vpop.f32.mrf.mxu0
        %1655 = vmatprep.mubr.bf16.mxu0 0
        %1656 = vmatmul.mubr.bf16.gmra.mxu0 %v1597
        %v1657 = vpop.f32.mrf.mxu0
        %v1658 = vadd.f32 0.0, %v1657
        %v1659 = vpop.f32.mrf.mxu0
        %v1660 = vpop.f32.mrf.mxu0
        %v1661 = vadd.f32 0.0, %v1660
        %v1662 = vpop.f32.mrf.mxu0
        %1663 = vdwg.mxu0
        %v1664 = vadd.f32 %v1550, %v1634
        %v1665 = vadd.f32 %v1551, %v1637
        %v1666 = vadd.f32 %v1552, %v1642
        %v1667 = vadd.f32 %v1553, %v1645
        %v1668 = vadd.f32 %v1554, %v1650
        %v1669 = vadd.f32 %v1555, %v1653
        %v1670 = vadd.f32 %v1556, %v1658
        %v1671 = vadd.f32 %v1557, %v1661
        %v1672 = vld [vmem:[#allocation2 + $0x19] sm:$0xff]
        %v1673 = vld [vmem:[#allocation2 + $0x21] sm:$0xff]
        %v1674 = vld [vmem:[#allocation2 + $0x29] sm:$0xff]
        %v1675 = vld [vmem:[#allocation2 + $0x31] sm:$0xff]
        %v1676 = vld [vmem:[#allocation2 + $0x39] sm:$0xff]
        %v1677 = vld [vmem:[#allocation2 + $0x41] sm:$0xff]
        %v1678 = vld [vmem:[#allocation2 + $0x49] sm:$0xff]
        %v1679 = vld [vmem:[#allocation2 + $0x51] sm:$0xff]
        %v1680 = vsel %vm956, %v1672, 0.0
        %v1681 = vsel %vm957, %v1673, 0.0
        %v1682 = vsel %vm958, %v1674, 0.0
        %v1683 = vsel %vm959, %v1675, 0.0
        %v1684 = vsel %vm960, %v1676, 0.0
        %v1685 = vsel %vm961, %v1677, 0.0
        %v1686 = vsel %vm962, %v1678, 0.0
        %v1687 = vsel %vm963, %v1679, 0.0
        %v1688 = vpack.c.bf16 %v1681, %v1680
        %v1689 = vpack.c.bf16 %v1683, %v1682
        %v1690 = vpack.c.bf16 %v1685, %v1684
        %v1691 = vpack.c.bf16 %v1687, %v1686
        %s1692 = scalar_lea.vmem [#allocation6], 128
        %v1693 = vld [vmem:[%s1692] sm:$0xf]
        %v1694 = vld [vmem:[%s1692 + $0x4] sm:$0xf]
        %v1695 = vld [vmem:[%s1692 + $0x8] sm:$0xf]
        %v1696 = vld [vmem:[%s1692 + $0xc] sm:$0xf]
        %v1701 = vunpack.c.l.b16 %v1693
        %v1702 = vunpack.c.l.b16 %v1694
        %v1703 = vunpack.c.l.b16 %v1695
        %v1704 = vunpack.c.l.b16 %v1696
        %v1705 = vpack.c.b16 %v1702, %v1701
        %v1706 = vpack.c.b16 %v1704, %v1703
        %v1710 = vsel %vm515, %v1688, 0
        %v1713 = vsel %vm515, %v1689, 0
        %v1716 = vsel %vm515, %v1690, 0
        %v1719 = vsel %vm515, %v1691, 0
        %1721 = vmatprep.subr.bf16.mxu0 0
        %1722 = vmatpush1.bf16.msra.mxu0 0
        %1723 = vmatprep.subr.bf16.mxu0 0
        %1724 = vmatpush1.bf16.msra.mxu0 0
        %1725 = vmatprep.subr.bf16.mxu0 0
        %1726 = vmatpush1.bf16.msra.mxu0 0
        %1727 = vmatprep.subr.bf16.mxu0 0
        %1728 = vmatpush1.bf16.msra.mxu0 0
        %1729 = vmatprep.subr.bf16.mxu0 0
        %1730 = vmatpush1.bf16.msra.mxu0 0
        %1731 = vmatprep.subr.bf16.mxu0 0
        %1732 = vmatpush1.bf16.msra.mxu0 0
        %1733 = vmatprep.subr.bf16.mxu0 0
        %1734 = vmatpush1.bf16.msra.mxu0 %v1706
        %1735 = vmatprep.subr.bf16.mxu0 0
        %1736 = vmatpush1.bf16.msra.mxu0 %v1705
        %1737 = vmatprep.subr.bf16.mxu0 0
        %1738 = vmatpush2.bf16.msra.mxu0 0
        %1739 = vmatprep.subr.bf16.mxu0 0
        %1740 = vmatpush2.bf16.msra.mxu0 0
        %1741 = vmatprep.subr.bf16.mxu0 0
        %1742 = vmatpush2.bf16.msra.mxu0 0
        %1743 = vmatprep.subr.bf16.mxu0 0
        %1744 = vmatpush2.bf16.msra.mxu0 0
        %1745 = vmatprep.subr.bf16.mxu0 0
        %1746 = vmatpush2.bf16.msra.mxu0 0
        %1747 = vmatprep.subr.bf16.mxu0 0
        %1748 = vmatpush2.bf16.msra.mxu0 0
        %1749 = vmatprep.subr.bf16.mxu0 0
        %1750 = vmatpush2.bf16.msra.mxu0 0
        %1751 = vmatprep.subr.bf16.mxu0 0
        %1752 = vmatpush2.bf16.msra.mxu0 0
        %1753 = vmatprep.mubr.bf16.mxu0 0
        %1754 = vmatmul.mubr.bf16.gmra.mxu0 %v1710
        %v1755 = vpop.f32.mrf.mxu0
        %v1756 = vadd.f32 0.0, %v1755
        %v1757 = vpop.f32.mrf.mxu0
        %v1758 = vpop.f32.mrf.mxu0
        %v1759 = vadd.f32 0.0, %v1758
        %v1760 = vpop.f32.mrf.mxu0
        %1761 = vmatprep.mubr.bf16.mxu0 0
        %1762 = vmatmul.mubr.bf16.gmra.mxu0 %v1713
        %v1763 = vpop.f32.mrf.mxu0
        %v1764 = vadd.f32 0.0, %v1763
        %v1765 = vpop.f32.mrf.mxu0
        %v1766 = vpop.f32.mrf.mxu0
        %v1767 = vadd.f32 0.0, %v1766
        %v1768 = vpop.f32.mrf.mxu0
        %1769 = vmatprep.mubr.bf16.mxu0 0
        %1770 = vmatmul.mubr.bf16.gmra.mxu0 %v1716
        %v1771 = vpop.f32.mrf.mxu0
        %v1772 = vadd.f32 0.0, %v1771
        %v1773 = vpop.f32.mrf.mxu0
        %v1774 = vpop.f32.mrf.mxu0
        %v1775 = vadd.f32 0.0, %v1774
        %v1776 = vpop.f32.mrf.mxu0
        %1777 = vmatprep.mubr.bf16.mxu0 0
        %1778 = vmatmul.mubr.bf16.gmra.mxu0 %v1719
        %v1779 = vpop.f32.mrf.mxu0
        %v1780 = vadd.f32 0.0, %v1779
        %v1781 = vpop.f32.mrf.mxu0
        %v1782 = vpop.f32.mrf.mxu0
        %v1783 = vadd.f32 0.0, %v1782
        %v1784 = vpop.f32.mrf.mxu0
        %1785 = vdwg.mxu0
        %v1786 = vadd.f32 %v1664, %v1756
        %v1787 = vadd.f32 %v1665, %v1759
        %v1788 = vadd.f32 %v1666, %v1764
        %v1789 = vadd.f32 %v1667, %v1767
        %v1790 = vadd.f32 %v1668, %v1772
        %v1791 = vadd.f32 %v1669, %v1775
        %v1792 = vadd.f32 %v1670, %v1780
        %v1793 = vadd.f32 %v1671, %v1783
        %v1794 = vld [vmem:[%s5] sm:$0x1]
        %v1795 = vlaneseq
        %v1796 = vshrl.u32 %v1795, 7
        %v1797 = vsub.s32 0, %v1796
        %v1798 = vrot.slane %v1794, %v1797
        %v1799 = vmul.f32 %v1786, %v1798
        %v1800 = vmul.f32 %v1787, %v1798
        %v1801 = vmul.f32 %v1788, %v1798
        %v1802 = vmul.f32 %v1789, %v1798
        %v1803 = vmul.f32 %v1790, %v1798
        %v1804 = vmul.f32 %v1791, %v1798
        %v1805 = vmul.f32 %v1792, %v1798
        %v1806 = vmul.f32 %v1793, %v1798
        %v1807 = vld [vmem:[%s5 + $0x1] sm:$0x1]
        %v1808 = vlaneseq
        %v1809 = vshrl.u32 %v1808, 7
        %v1810 = vsub.s32 0, %v1809
        %v1811 = vrot.slane %v1807, %v1810
        %v1812 = vadd.f32 %v1799, %v1811
        %v1813 = vadd.f32 %v1800, %v1811
        %v1814 = vadd.f32 %v1801, %v1811
        %v1815 = vadd.f32 %v1802, %v1811
        %v1816 = vadd.f32 %v1803, %v1811
        %v1817 = vadd.f32 %v1804, %v1811
        %v1818 = vadd.f32 %v1805, %v1811
        %v1819 = vadd.f32 %v1806, %v1811
        %v1820 = vmax.f32 %v1812, 0.0
        %v1821 = vmax.f32 %v1813, 0.0
        %v1822 = vmax.f32 %v1814, 0.0
        %v1823 = vmax.f32 %v1815, 0.0
        %v1824 = vmax.f32 %v1816, 0.0
        %v1825 = vmax.f32 %v1817, 0.0
        %v1826 = vmax.f32 %v1818, 0.0
        %v1827 = vmax.f32 %v1819, 0.0
        %v1828 = vpack.c.bf16 %v1821, %v1820
        %v1829 = vpack.c.bf16 %v1823, %v1822
        %v1830 = vpack.c.bf16 %v1825, %v1824
        %v1831 = vpack.c.bf16 %v1827, %v1826
        %v1832 = vld [vmem:[%s3] sm:$0xf]
        %v1833 = vld [vmem:[%s3 + $0x4] sm:$0xf]
        %v1834 = vld [vmem:[%s3 + $0x8] sm:$0xf]
        %v1835 = vld [vmem:[%s3 + $0xc] sm:$0xf]
        %v1840 = vunpack.c.l.b16 %v1832
        %v1841 = vunpack.c.l.b16 %v1833
        %v1842 = vunpack.c.l.b16 %v1834
        %v1843 = vunpack.c.l.b16 %v1835
        %v1844 = vpack.c.b16 %v1841, %v1840
        %v1845 = vpack.c.b16 %v1843, %v1842
        %v1849 = vsel %vm515, %v1828, 0
        %v1852 = vsel %vm515, %v1829, 0
        %v1855 = vsel %vm515, %v1830, 0
        %v1858 = vsel %vm515, %v1831, 0
        %1860 = vmatprep.subr.bf16.mxu0 0
        %1861 = vmatpush1.bf16.msra.mxu0 0
        %1862 = vmatprep.subr.bf16.mxu0 0
        %1863 = vmatpush1.bf16.msra.mxu0 0
        %1864 = vmatprep.subr.bf16.mxu0 0
        %1865 = vmatpush1.bf16.msra.mxu0 0
        %1866 = vmatprep.subr.bf16.mxu0 0
        %1867 = vmatpush1.bf16.msra.mxu0 0
        %1868 = vmatprep.subr.bf16.mxu0 0
        %1869 = vmatpush1.bf16.msra.mxu0 0
        %1870 = vmatprep.subr.bf16.mxu0 0
        %1871 = vmatpush1.bf16.msra.mxu0 0
        %1872 = vmatprep.subr.bf16.mxu0 0
        %1873 = vmatpush1.bf16.msra.mxu0 %v1845
        %1874 = vmatprep.subr.bf16.mxu0 0
        %1875 = vmatpush1.bf16.msra.mxu0 %v1844
        %1876 = vmatprep.subr.bf16.mxu0 0
        %1877 = vmatpush2.bf16.msra.mxu0 0
        %1878 = vmatprep.subr.bf16.mxu0 0
        %1879 = vmatpush2.bf16.msra.mxu0 0
        %1880 = vmatprep.subr.bf16.mxu0 0
        %1881 = vmatpush2.bf16.msra.mxu0 0
        %1882 = vmatprep.subr.bf16.mxu0 0
        %1883 = vmatpush2.bf16.msra.mxu0 0
        %1884 = vmatprep.subr.bf16.mxu0 0
        %1885 = vmatpush2.bf16.msra.mxu0 0
        %1886 = vmatprep.subr.bf16.mxu0 0
        %1887 = vmatpush2.bf16.msra.mxu0 0
        %1888 = vmatprep.subr.bf16.mxu0 0
        %1889 = vmatpush2.bf16.msra.mxu0 0
        %1890 = vmatprep.subr.bf16.mxu0 0
        %1891 = vmatpush2.bf16.msra.mxu0 0
        %1892 = vmatprep.mubr.bf16.mxu0 0
        %1893 = vmatmul.mubr.bf16.gmra.mxu0 %v1849
        %v1894 = vpop.f32.mrf.mxu0
        %v1895 = vadd.f32 0.0, %v1894
        %v1896 = vpop.f32.mrf.mxu0
        %v1897 = vpop.f32.mrf.mxu0
        %v1898 = vadd.f32 0.0, %v1897
        %v1899 = vpop.f32.mrf.mxu0
        %1900 = vmatprep.mubr.bf16.mxu0 0
        %1901 = vmatmul.mubr.bf16.gmra.mxu0 %v1852
        %v1902 = vpop.f32.mrf.mxu0
        %v1903 = vadd.f32 0.0, %v1902
        %v1904 = vpop.f32.mrf.mxu0
        %v1905 = vpop.f32.mrf.mxu0
        %v1906 = vadd.f32 0.0, %v1905
        %v1907 = vpop.f32.mrf.mxu0
        %1908 = vmatprep.mubr.bf16.mxu0 0
        %1909 = vmatmul.mubr.bf16.gmra.mxu0 %v1855
        %v1910 = vpop.f32.mrf.mxu0
        %v1911 = vadd.f32 0.0, %v1910
        %v1912 = vpop.f32.mrf.mxu0
        %v1913 = vpop.f32.mrf.mxu0
        %v1914 = vadd.f32 0.0, %v1913
        %v1915 = vpop.f32.mrf.mxu0
        %1916 = vmatprep.mubr.bf16.mxu0 0
        %1917 = vmatmul.mubr.bf16.gmra.mxu0 %v1858
        %v1918 = vpop.f32.mrf.mxu0
        %v1919 = vadd.f32 0.0, %v1918
        %v1920 = vpop.f32.mrf.mxu0
        %v1921 = vpop.f32.mrf.mxu0
        %v1922 = vadd.f32 0.0, %v1921
        %v1923 = vpop.f32.mrf.mxu0
        %1924 = vdwg.mxu0
        %v1925 = vld [vmem:[%s6] sm:$0x1]
        %v1926 = vlaneseq
        %v1927 = vshrl.u32 %v1926, 7
        %v1928 = vsub.s32 0, %v1927
        %v1929 = vrot.slane %v1925, %v1928
        %v1930 = vmul.f32 %v1895, %v1929
        %v1931 = vmul.f32 %v1898, %v1929
        %v1932 = vmul.f32 %v1903, %v1929
        %v1933 = vmul.f32 %v1906, %v1929
        %v1934 = vmul.f32 %v1911, %v1929
        %v1935 = vmul.f32 %v1914, %v1929
        %v1936 = vmul.f32 %v1919, %v1929
        %v1937 = vmul.f32 %v1922, %v1929
        %v1938 = vld [vmem:[%s6 + $0x1] sm:$0x1]
        %v1939 = vlaneseq
        %v1940 = vshrl.u32 %v1939, 7
        %v1941 = vsub.s32 0, %v1940
        %v1942 = vrot.slane %v1938, %v1941
        %v1943 = vadd.f32 %v1930, %v1942
        %v1944 = vadd.f32 %v1931, %v1942
        %v1945 = vadd.f32 %v1932, %v1942
        %v1946 = vadd.f32 %v1933, %v1942
        %v1947 = vadd.f32 %v1934, %v1942
        %v1948 = vadd.f32 %v1935, %v1942
        %v1949 = vadd.f32 %v1936, %v1942
        %v1950 = vadd.f32 %v1937, %v1942
        %v1951 = vadd.f32 %v1943, %v1944
        %v1952 = vadd.f32 %v1951, %v1945
        %v1953 = vadd.f32 %v1952, %v1946
        %v1954 = vadd.f32 %v1953, %v1947
        %v1955 = vadd.f32 %v1954, %v1948
        %v1956 = vadd.f32 %v1955, %v1949
        %v1957 = vadd.f32 %v1956, %v1950
        %v1958 = vrot.slane %v1957, 4
        %v1959 = vadd.f32 %v1957, %v1958
        %v1960 = vrot.slane %v1959, 2
        %v1961 = vadd.f32 %v1959, %v1960
        %v1962 = vrot.slane %v1961, 1
        %v1963 = vadd.f32 %v1961, %v1962
        %v1964 = vrcp.pop 64.0
        %v1965 = vmul.f32 %v1963, %v1964
        %v1966 = vsub.f32 %v1943, %v1965
        %v1967 = vsub.f32 %v1944, %v1965
        %v1968 = vsub.f32 %v1945, %v1965
        %v1969 = vsub.f32 %v1946, %v1965
        %v1970 = vsub.f32 %v1947, %v1965
        %v1971 = vsub.f32 %v1948, %v1965
        %v1972 = vsub.f32 %v1949, %v1965
        %v1973 = vsub.f32 %v1950, %v1965
        %v1974 = vmul.f32 %v1966, %v1966
        %v1975 = vmul.f32 %v1967, %v1967
        %v1976 = vmul.f32 %v1968, %v1968
        %v1977 = vmul.f32 %v1969, %v1969
        %v1978 = vmul.f32 %v1970, %v1970
        %v1979 = vmul.f32 %v1971, %v1971
        %v1980 = vmul.f32 %v1972, %v1972
        %v1981 = vmul.f32 %v1973, %v1973
        %v1982 = vadd.f32 %v1974, %v1975
        %v1983 = vadd.f32 %v1982, %v1976
        %v1984 = vadd.f32 %v1983, %v1977
        %v1985 = vadd.f32 %v1984, %v1978
        %v1986 = vadd.f32 %v1985, %v1979
        %v1987 = vadd.f32 %v1986, %v1980
        %v1988 = vadd.f32 %v1987, %v1981
        %v1989 = vrot.slane %v1988, 4
        %v1990 = vadd.f32 %v1988, %v1989
        %v1991 = vrot.slane %v1990, 2
        %v1992 = vadd.f32 %v1990, %v1991
        %v1993 = vrot.slane %v1992, 1
        %v1994 = vadd.f32 %v1992, %v1993
        %v1995 = vmul.f32 %v1994, %v1964
        %v1996 = vadd.f32 %v1995, 1e-05
        %v1997 = vrsqrt.pop %v1996
        %v1998 = vld [vmem:[%s7] sm:$0x1]
        %v1999 = vmul.f32 %v1998, %v1965
        %v2000 = vld [vmem:[%s7 + $0x1] sm:$0x1]
        %v2001 = vmul.f32 %v1966, %v1997
        %v2002 = vmul.f32 %v1967, %v1997
        %v2003 = vmul.f32 %v1968, %v1997
        %v2004 = vmul.f32 %v1969, %v1997
        %v2005 = vmul.f32 %v1970, %v1997
        %v2006 = vmul.f32 %v1971, %v1997
        %v2007 = vmul.f32 %v1972, %v1997
        %v2008 = vmul.f32 %v1973, %v1997
        %v2009 = vlaneseq
        %v2010 = vshrl.u32 %v2009, 7
        %v2011 = vsub.s32 0, %v2010
        %v2012 = vrot.slane %v2000, %v2011
        %v2013 = vmul.f32 %v2012, %v2001
        %v2014 = vmul.f32 %v2012, %v2002
        %v2015 = vmul.f32 %v2012, %v2003
        %v2016 = vmul.f32 %v2012, %v2004
        %v2017 = vmul.f32 %v2012, %v2005
        %v2018 = vmul.f32 %v2012, %v2006
        %v2019 = vmul.f32 %v2012, %v2007
        %v2020 = vmul.f32 %v2012, %v2008
        %v2021 = vlaneseq
        %v2022 = vshrl.u32 %v2021, 7
        %v2023 = vsub.s32 0, %v2022
        %v2024 = vrot.slane %v1999, %v2023
        %v2025 = vadd.f32 %v2024, %v2013
        %v2026 = vadd.f32 %v2024, %v2014
        %v2027 = vadd.f32 %v2024, %v2015
        %v2028 = vadd.f32 %v2024, %v2016
        %v2029 = vadd.f32 %v2024, %v2017
        %v2030 = vadd.f32 %v2024, %v2018
        %v2031 = vadd.f32 %v2024, %v2019
        %v2032 = vadd.f32 %v2024, %v2020
        %v2033 = vld [vmem:[%s7 + $0x2] sm:$0x1]
        %v2034 = vlaneseq
        %v2035 = vshrl.u32 %v2034, 7
        %v2036 = vsub.s32 0, %v2035
        %v2037 = vrot.slane %v2033, %v2036
        %v2038 = vadd.f32 %v2025, %v2037
        %v2039 = vadd.f32 %v2026, %v2037
        %v2040 = vadd.f32 %v2027, %v2037
        %v2041 = vadd.f32 %v2028, %v2037
        %v2042 = vadd.f32 %v2029, %v2037
        %v2043 = vadd.f32 %v2030, %v2037
        %v2044 = vadd.f32 %v2031, %v2037
        %v2045 = vadd.f32 %v2032, %v2037
        %v2046 = vxor.u32 %v2038, 2147483648
        %v2047 = vxor.u32 %v2039, 2147483648
        %v2048 = vxor.u32 %v2040, 2147483648
        %v2049 = vxor.u32 %v2041, 2147483648
        %v2050 = vxor.u32 %v2042, 2147483648
        %v2051 = vxor.u32 %v2043, 2147483648
        %v2052 = vxor.u32 %v2044, 2147483648
        %v2053 = vxor.u32 %v2045, 2147483648
        %v2054 = vmul.f32 %v2046, 1.442695
        %v2055 = vpow.pop %v2054
        %v2056 = vmul.f32 %v2047, 1.442695
        %v2057 = vpow.pop %v2056
        %v2058 = vmul.f32 %v2048, 1.442695
        %v2059 = vpow.pop %v2058
        %v2060 = vmul.f32 %v2049, 1.442695
        %v2061 = vpow.pop %v2060
        %v2062 = vmul.f32 %v2050, 1.442695
        %v2063 = vpow.pop %v2062
        %v2064 = vmul.f32 %v2051, 1.442695
        %v2065 = vpow.pop %v2064
        %v2066 = vmul.f32 %v2052, 1.442695
        %v2067 = vpow.pop %v2066
        %v2068 = vmul.f32 %v2053, 1.442695
        %v2069 = vpow.pop %v2068
        %v2070 = vadd.f32 %v2055, 1.0
        %v2071 = vadd.f32 %v2057, 1.0
        %v2072 = vadd.f32 %v2059, 1.0
        %v2073 = vadd.f32 %v2061, 1.0
        %v2074 = vadd.f32 %v2063, 1.0
        %v2075 = vadd.f32 %v2065, 1.0
        %v2076 = vadd.f32 %v2067, 1.0
        %v2077 = vadd.f32 %v2069, 1.0
        %v2078 = vrcp.pop %v2070
        %v2079 = vmul.f32 1.0, %v2078
        %v2080 = vrcp.pop %v2071
        %v2081 = vmul.f32 1.0, %v2080
        %v2082 = vrcp.pop %v2072
        %v2083 = vmul.f32 1.0, %v2082
        %v2084 = vrcp.pop %v2073
        %v2085 = vmul.f32 1.0, %v2084
        %v2086 = vrcp.pop %v2074
        %v2087 = vmul.f32 1.0, %v2086
        %v2088 = vrcp.pop %v2075
        %v2089 = vmul.f32 1.0, %v2088
        %v2090 = vrcp.pop %v2076
        %v2091 = vmul.f32 1.0, %v2090
        %v2092 = vrcp.pop %v2077
        %v2093 = vmul.f32 1.0, %v2092
        %v2094 = vmul.f32 %v1943, %v2079
        %v2095 = vmul.f32 %v1944, %v2081
        %v2096 = vmul.f32 %v1945, %v2083
        %v2097 = vmul.f32 %v1946, %v2085
        %v2098 = vmul.f32 %v1947, %v2087
        %v2099 = vmul.f32 %v1948, %v2089
        %v2100 = vmul.f32 %v1949, %v2091
        %v2101 = vmul.f32 %v1950, %v2093
        %v2102 = vadd.f32 %v2094, %v340
        %v2103 = vadd.f32 %v2095, %v341
        %v2104 = vadd.f32 %v2096, %v342
        %v2105 = vadd.f32 %v2097, %v343
        %v2106 = vadd.f32 %v2098, %v344
        %v2107 = vadd.f32 %v2099, %v345
        %v2108 = vadd.f32 %v2100, %v346
        %v2109 = vadd.f32 %v2101, %v347
        %v2110 = vmax.f32 %v2102, 0.0
        %v2111 = vmax.f32 %v2103, 0.0
        %v2112 = vmax.f32 %v2104, 0.0
        %v2113 = vmax.f32 %v2105, 0.0
        %v2114 = vmax.f32 %v2106, 0.0
        %v2115 = vmax.f32 %v2107, 0.0
        %v2116 = vmax.f32 %v2108, 0.0
        %v2117 = vmax.f32 %v2109, 0.0
        %2118 = vst [vmem:[%s338] sm:$0xff] %v2110
        %2119 = vst [vmem:[%s338 + $0x8] sm:$0xff] %v2111
        %2120 = vst [vmem:[%s338 + $0x10] sm:$0xff] %v2112
        %2121 = vst [vmem:[%s338 + $0x18] sm:$0xff] %v2113
        %2122 = vst [vmem:[%s338 + $0x20] sm:$0xff] %v2114
        %2123 = vst [vmem:[%s338 + $0x28] sm:$0xff] %v2115
        %2124 = vst [vmem:[%s338 + $0x30] sm:$0xff] %v2116
        %2125 = vst [vmem:[%s338 + $0x38] sm:$0xff] %v2117
        %s2126 = sand.u32 %s207, 1
        %s2127 = scalar_lea.sflag [#allocation5], %s2126
        %s2128 = sand.u32 %s207, 1
        %s2129 = smul.addr %s2128, 64
        %s2130 = scalar_lea.vmem [#allocation8], %s2129
        // Predicated region
        $region61: #{_lambda_.1} parent=51 // pred_check
          %p2131 = pneg %p217
        $region62: #{_lambda_.1} parent=51 // pred_check_branch
          %2133 = sbr.rel (%p2131) target = $region64
        $region63: #{_lambda_.1} parent=51 // pred_region
          %s2135 = ssub.s32 1024, 1024
          %2136 = vsyncadd %s2127, %s2135
          %s2137 = smul.addr %s26, 8
          %s2138 = smul.addr %s2137, 128
          %s2139 = scalar_lea.hbm %s8, %s2138
          %s2140 = sshll.u32 %s2130, 4
          %s2141 = int_to_ptr.vmem [resolvable:$true] %s2140
          %2146 = dma.vmem_to_hbm [thread:$0]  %s2141, 1024, %s2139, %s2127, 128, 128, 8
        $region64: #{_lambda_.1} parent=51 // pred_fallthru
          _
      $region52: #{_lambda_.1} parent=5 // pred_fallthru
        _
      %p2147 = scmp.le.s32.totalorder 2, %s21
      // Predicated region
      $region65: #{_lambda_.1} parent=5 // pred_check
        %p2148 = pneg %p2147
      $region66: #{_lambda_.1} parent=5 // pred_check_branch
        %2150 = sbr.rel (%p2148) target = $region68
      $region67: #{_lambda_.1} parent=5 // pred_region
        %s2151 = ssub.s32 %s21, 2
        // Predicated region
        $region69: #{_lambda_.1} parent=67 // pred_check
          %p2152 = pneg %p223
        $region70: #{_lambda_.1} parent=67 // pred_check_branch
          %2154 = sbr.rel (%p2152) target = $region72
        $region71: #{_lambda_.1} parent=67 // pred_region
          %s2155 = sand.u32 %s208, 1
          %s2156 = scalar_lea.sflag [#allocation5], %s2155
          %s2157 = sand.u32 %s208, 1
          %s2158 = smul.addr %s2157, 64
          %s2159 = scalar_lea.vmem [#allocation8], %s2158
          %2160 = dma.done %s2156, 1024
        $region72: #{_lambda_.1} parent=67 // pred_fallthru
          _
      $region68: #{_lambda_.1} parent=5 // pred_fallthru
        _
    $region6: #{_lambda_.1} parent=1 // loop_footer
      %s25 = sadd.s32 1, %s21
    $region7: #{_lambda_.1} parent=1 // loop_footer_branch
      %20 = sbr.rel target = $region3
    $region8: #{_lambda_.1} parent=1 // loop_exit
      _
    %2161 = vsyncpa [#allocation4], 1
    %s2162 = scalar_lea.sflag [#allocation4], 1
    %2163 = vsyncpa %s2162, 1
    %2164 = vsyncpa [#allocation7], 1
    %2165 = vsyncpa [#allocation5], 1
    %s2166 = scalar_lea.sflag [#allocation5], 1
    %2167 = vsyncpa %s2166, 1

</llo_original>
